<compile_context>
chip_gen: v7x
topology: tpu7x:2x2x1
jax: 0.10.0
libtpu: 0.0.40
codegen_flags: <defaults>
</compile_context>

<pallas_src>
import functools
import math

import jax
import jax.numpy as jnp
from jax.experimental import pallas as pl
from jax.experimental.pallas import tpu as pltpu


# MXU-input dtype: bf16 inputs + f32 accumulation.  Set to jnp.float32 for
# bit-closer parity with the fp32 PyTorch reference.
_MXU_DTYPE = jnp.bfloat16


# ----------------------------- in-kernel helpers ----------------------------- #

def _ln(x, g, b, eps=1e-5):
    """Row-wise LayerNorm over the last (feature) axis; x:(S,H), g/b:(1,H)."""
    mean = jnp.mean(x, axis=-1, keepdims=True)
    var = jnp.mean((x - mean) ** 2, axis=-1, keepdims=True)
    return (x - mean) * jax.lax.rsqrt(var + eps) * g + b


def _gelu_exact(y):
    """Exact GELU (matches nn.GELU(approximate='none'))."""
    return 0.5 * y * (1.0 + jax.lax.erf(y * (1.0 / math.sqrt(2.0))))


# ------------------------------- fused kernel ------------------------------- #

def _fused_vit_kernel(patches_ref, patch_w_ref, patch_b_ref, pos_ref, cls_ref,
                      ln1_g_ref, ln1_b_ref, w_qkv_ref, w_out_ref, b_out_ref,
                      ln2_g_ref, ln2_b_ref, w_fc1_ref, b_fc1_ref, w_fc2_ref,
                      b_fc2_ref, norm_g_ref, norm_b_ref,
                      o_ref, x_scr, *,
                      nh, s_real, n_patches, num_layers, row_start):
    """One (batch-element, layer) grid step of the fully fused ViT forward."""
    layer = pl.program_id(1)
    s_pad, hsz = x_scr.shape
    dh = hsz // nh
    scale = jnp.float32(dh ** -0.5)

    # --- patch embedding + cls-token prepend + zero pad (first layer only) ---
    @pl.when(layer == 0)
    def _():
        p = patches_ref[...].astype(_MXU_DTYPE)                     # (Np, Pd)
        w = patch_w_ref[...].astype(_MXU_DTYPE)                     # (Pd, H)
        y = jnp.dot(p, w, preferred_element_type=jnp.float32)
        y = y + patch_b_ref[...] + pos_ref[...]                     # (Np, H)
        # sliced stores (no concatenate): zero once, then cls row + patch rows
        x_scr[...] = jnp.zeros_like(x_scr)
        x_scr[0:1, :] = cls_ref[...].astype(jnp.float32)
        x_scr[1:1 + n_patches, :] = y

    x = x_scr[...]                                                  # (S_pad, H) f32

    # --- attention branch: x + out_proj(MHA(LN1(x))) ---
    xn = _ln(x, ln1_g_ref[...], ln1_b_ref[...])
    qkv = jnp.dot(xn.astype(_MXU_DTYPE), w_qkv_ref[...].astype(_MXU_DTYPE),
                  preferred_element_type=jnp.float32)               # (S_pad, 3H)

    # per-head score tiles packed side-by-side on the lane axis: (S_pad, nh*S_pad)
    scores = []
    for h in range(nh):
        q = qkv[:, h * dh:(h + 1) * dh].astype(_MXU_DTYPE)
        k = qkv[:, hsz + h * dh: hsz + (h + 1) * dh].astype(_MXU_DTYPE)
        scores.append(jax.lax.dot_general(q, k, (((1,), (1,)), ((), ())),
                                          preferred_element_type=jnp.float32))
    s_all = jnp.concatenate(scores, axis=-1) * scale

    # additive mask for padded key positions (>= s_real) within each head block
    key_ok = jax.lax.broadcasted_iota(jnp.int32, (1, s_pad), 1) < s_real
    mask_add = jnp.where(key_ok, jnp.float32(0.0), jnp.float32(-1e30))
    mask_add = jnp.tile(mask_add, (1, nh))                          # (1, nh*S_pad)
    s_all = s_all + mask_add
    # subtracting any per-row constant is exact for softmax; use the packed max
    s_all = s_all - jnp.max(s_all, axis=-1, keepdims=True)
    p_all = jnp.exp(s_all)

    # per-head softmax normalization + value matmul + out-proj accumulation
    w_out = w_out_ref[...]
    attn = jnp.zeros((s_pad, hsz), jnp.float32)                     # lane-dense acc
    for h in range(nh):
        p = p_all[:, h * s_pad:(h + 1) * s_pad]
        p = p * pl.reciprocal(jnp.sum(p, axis=-1, keepdims=True), approx=True)
        v = qkv[:, 2 * hsz + h * dh: 2 * hsz + (h + 1) * dh].astype(_MXU_DTYPE)
        head = jnp.dot(p.astype(_MXU_DTYPE), v,
                       preferred_element_type=jnp.float32)          # (S_pad, dh)
        attn = attn + jnp.dot(head.astype(_MXU_DTYPE),
                              w_out[h * dh:(h + 1) * dh, :].astype(_MXU_DTYPE),
                              preferred_element_type=jnp.float32)
    x = x + attn + b_out_ref[...]

    # --- MLP branch: x + fc2(GELU(fc1(LN2(x)))) ---
    xn = _ln(x, ln2_g_ref[...], ln2_b_ref[...])
    h1 = jnp.dot(xn.astype(_MXU_DTYPE), w_fc1_ref[...].astype(_MXU_DTYPE),
                 preferred_element_type=jnp.float32) + b_fc1_ref[...]
    h1 = _gelu_exact(h1)
    h2 = jnp.dot(h1.astype(_MXU_DTYPE), w_fc2_ref[...].astype(_MXU_DTYPE),
                 preferred_element_type=jnp.float32) + b_fc2_ref[...]
    x = x + h2

    x_scr[...] = x

    # --- final LayerNorm + feature select (last layer only) ---
    @pl.when(layer == num_layers - 1)
    def _():
        rows = o_ref.shape[0]
        xs = x[row_start:row_start + rows, :]      # slice BEFORE normalizing
        o_ref[...] = _ln(xs, norm_g_ref[...], norm_b_ref[...]).astype(o_ref.dtype)


# ------------------------------ kernel wrapper ------------------------------ #

def vit_forward_fused(patches, params, *, nh, s_pad, row_start, row_count):
    """Single pallas_call running the whole ViT forward; grid=(B, L)."""
    B, Np, Pd = patches.shape
    H = params["patch_w"].shape[1]
    M = params["blocks"][0]["w_fc1"].shape[1]
    L = len(params["blocks"])
    s_real = Np + 1

    stack = lambda name, shape: jnp.stack(
        [blk[name].reshape(shape) for blk in params["blocks"]])

    kernel = functools.partial(
        _fused_vit_kernel, nh=nh, s_real=s_real, n_patches=Np,
        num_layers=L, row_start=row_start)

    def per_layer(shape):      # layer-streamed weights: block index follows l
        return pl.BlockSpec((None,) + shape, lambda b, l: (l, 0, 0))

    def const(shape):          # layer-invariant params: fetched once per b
        return pl.BlockSpec(shape, lambda b, l: (0, 0))

    grid_spec = pltpu.PrefetchScalarGridSpec(
        num_scalar_prefetch=0,
        grid=(B, L),
        in_specs=[
            pl.BlockSpec((None, Np, Pd), lambda b, l: (b, 0, 0)),   # patches
            const((Pd, H)),            # patch_w
            const((1, H)),             # patch_b
            const((Np, H)),            # pos_emb
            const((1, H)),             # cls_token
            per_layer((1, H)),         # ln1_g
            per_layer((1, H)),         # ln1_b
            per_layer((H, 3 * H)),     # w_qkv (qkv_bias=False -> no bias)
            per_layer((H, H)),         # w_out
            per_layer((1, H)),         # b_out
            per_layer((1, H)),         # ln2_g
            per_layer((1, H)),         # ln2_b
            per_layer((H, M)),         # w_fc1
            per_layer((1, M)),         # b_fc1
            per_layer((M, H)),         # w_fc2
            per_layer((1, H)),         # b_fc2
            const((1, H)),             # norm_g
            const((1, H)),             # norm_b
        ],
        out_specs=pl.BlockSpec((None, row_count, H), lambda b, l: (b, 0, 0)),
        scratch_shapes=[pltpu.VMEM((s_pad, H), jnp.float32)],       # x accumulator
    )

    return pl.pallas_call(
        kernel,
        out_shape=jax.ShapeDtypeStruct((B, row_count, H), patches.dtype),
        grid_spec=grid_spec,
        compiler_params=pltpu.CompilerParams(
            dimension_semantics=("parallel", "arbitrary"),
            vmem_limit_bytes=32 * 1024 * 1024),
    )(patches,
      params["patch_w"], params["patch_b"].reshape(1, H),
      params["pos_emb"].reshape(Np, H), params["cls_token"].reshape(1, H),
      stack("ln1_g", (1, H)), stack("ln1_b", (1, H)),
      stack("w_qkv", (H, 3 * H)), stack("w_out", (H, H)),
      stack("b_out", (1, H)),
      stack("ln2_g", (1, H)), stack("ln2_b", (1, H)),
      stack("w_fc1", (H, M)), stack("b_fc1", (1, M)),
      stack("w_fc2", (M, H)), stack("b_fc2", (1, H)),
      params["norm_g"].reshape(1, H), params["norm_b"].reshape(1, H))


# ----------------------------- model definition ---------------------------- #

class Config:
    image_channel = 1
    image_size = (16, 16, 16)
    patch_size = (8, 8, 8)
    vision_select_layer = -1
    vision_select_feature = "patch"
    # ViT hyperparams (small, kernel-demo sized; MONAI defaults are 768/3072/12/12)
    hidden_size = 128
    mlp_dim = 256
    num_layers = 2
    num_heads = 4


def init_params(cfg, key):
    C = cfg.image_channel
    pD, pH, pW = cfg.patch_size
    patch_dim = C * pD * pH * pW
    n_patches = 1
    for s, p in zip(cfg.image_size, cfg.patch_size):
        n_patches *= s // p
    H, M, L = cfg.hidden_size, cfg.mlp_dim, cfg.num_layers

    keys = iter(jax.random.split(key, 4 + 6 * L))
    std = 0.02
    params = {
        "patch_w": jax.random.normal(next(keys), (patch_dim, H), jnp.float32) * std,
        "patch_b": jnp.zeros((H,), jnp.float32),
        "pos_emb": jax.random.normal(next(keys), (1, n_patches, H), jnp.float32) * std,
        "cls_token": jnp.zeros((1, 1, H), jnp.float32),   # matches torch.zeros init
        "norm_g": jnp.ones((H,), jnp.float32),
        "norm_b": jnp.zeros((H,), jnp.float32),
        "blocks": [],
    }
    for _ in range(L):
        blk = {
            "ln1_g": jnp.ones((H,), jnp.float32),
            "ln1_b": jnp.zeros((H,), jnp.float32),
            "w_qkv": jax.random.normal(next(keys), (H, 3 * H), jnp.float32) * std,
            "w_out": jax.random.normal(next(keys), (H, H), jnp.float32) * std,
            "b_out": jnp.zeros((H,), jnp.float32),
            "ln2_g": jnp.ones((H,), jnp.float32),
            "ln2_b": jnp.zeros((H,), jnp.float32),
            "w_fc1": jax.random.normal(next(keys), (H, M), jnp.float32) * std,
            "b_fc1": jnp.zeros((M,), jnp.float32),
            "w_fc2": jax.random.normal(next(keys), (M, H), jnp.float32) * std,
            "b_fc2": jnp.zeros((H,), jnp.float32),
        }
        params["blocks"].append(blk)
    return params


def patchify(x, patch_size):
    """Rearrange 'b c (h p1) (w p2) (d p3) -> b (h w d) (p1 p2 p3 c)' (MONAI perceptron mode)."""
    B, C, D1, D2, D3 = x.shape
    p1, p2, p3 = patch_size
    h, w, d = D1 // p1, D2 // p2, D3 // p3
    x = x.reshape(B, C, h, p1, w, p2, d, p3)
    x = jnp.transpose(x, (0, 2, 4, 6, 3, 5, 7, 1))  # B, h, w, d, p1, p2, p3, C
    return x.reshape(B, h * w * d, p1 * p2 * p3 * C)


def vit3d_tower_forward(cfg, params, pet, masks=None):
    """ViT3DTower.forward(pet, masks): use_mask=False so masks is ignored."""
    patches = patchify(pet, cfg.patch_size)                  # (B, Np, patch_dim)
    Np = patches.shape[1]
    s_real = Np + 1                                          # cls + patches
    s_pad = max(8, ((s_real + 7) // 8) * 8)                  # sublane-aligned seq

    if cfg.vision_select_layer == -1:
        if cfg.vision_select_feature == "patch":
            row_start, row_count = 1, Np                     # drop cls token
        elif cfg.vision_select_feature in ("no_cls_patch", "cls_patch"):
            row_start, row_count = 0, s_real
        else:
            raise ValueError("Unexpected select feature")
    elif cfg.vision_select_layer < -1:
        # TODO(synk): select_layer < -1 needs per-layer hidden-state outputs,
        # which breaks the single fused pass; config uses select_layer=-1.
        raise NotImplementedError("vision_select_layer < -1 not supported")
    else:
        raise ValueError("Unexpected select layer")

    return vit_forward_fused(patches, params, nh=cfg.num_heads, s_pad=s_pad,
                             row_start=row_start, row_count=row_count)


# ----------------------------------- main ----------------------------------- #

if __name__ == "__main__":
    cfg = Config()
    key = jax.random.PRNGKey(0)
    kp, kpet, kmask = jax.random.split(key, 3)

    params = init_params(cfg, kp)

    B = 2
    pet = jax.random.normal(kpet, (B, cfg.image_channel) + cfg.image_size, jnp.float32)
    masks = jax.random.normal(kmask, (B, 1) + cfg.image_size, jnp.float32)  # ignored (use_mask=False)

    fwd = jax.jit(lambda p, img, m: vit3d_tower_forward(cfg, p, img, m))
    out = jax.block_until_ready(fwd(params, pet, masks))

    n_patches = 1
    for s, p in zip(cfg.image_size, cfg.patch_size):
        n_patches *= s // p

    # expected: (B, n_patches, hidden) = (2, 8, 128) after cls-token removal
    assert out.shape == (B, n_patches, cfg.hidden_size), out.shape
    assert bool(jnp.all(jnp.isfinite(out)))
    print("KERNEL_OK")
</pallas_src>

<mosaic_0001>
module attributes {stable_mosaic.version = 11 : i64} {
  func.func @_fused_vit_kernel(%arg0: i32, %arg1: i32, %arg2: memref<1x8x512xf32, #tpu.memory_space<vmem>>, %arg3: memref<512x128xf32, #tpu.memory_space<vmem>>, %arg4: memref<1x128xf32, #tpu.memory_space<vmem>>, %arg5: memref<8x128xf32, #tpu.memory_space<vmem>>, %arg6: memref<1x128xf32, #tpu.memory_space<vmem>>, %arg7: memref<1x1x128xf32, #tpu.memory_space<vmem>>, %arg8: memref<1x1x128xf32, #tpu.memory_space<vmem>>, %arg9: memref<1x128x384xf32, #tpu.memory_space<vmem>>, %arg10: memref<1x128x128xf32, #tpu.memory_space<vmem>>, %arg11: memref<1x1x128xf32, #tpu.memory_space<vmem>>, %arg12: memref<1x1x128xf32, #tpu.memory_space<vmem>>, %arg13: memref<1x1x128xf32, #tpu.memory_space<vmem>>, %arg14: memref<1x128x256xf32, #tpu.memory_space<vmem>>, %arg15: memref<1x1x256xf32, #tpu.memory_space<vmem>>, %arg16: memref<1x256x128xf32, #tpu.memory_space<vmem>>, %arg17: memref<1x1x128xf32, #tpu.memory_space<vmem>>, %arg18: memref<1x128xf32, #tpu.memory_space<vmem>>, %arg19: memref<1x128xf32, #tpu.memory_space<vmem>>, %arg20: memref<1x8x128xf32, #tpu.memory_space<vmem>>, %arg21: memref<16x128xf32, #tpu.memory_space<vmem>>) attributes {dimension_semantics = [#tpu.dimension_semantics<parallel>, #tpu.dimension_semantics<arbitrary>], iteration_bounds = array<i64: 2, 2>, scalar_prefetch = 0 : i64, scratch_operands = 1 : i64, tpu.core_type = #tpu.core_type<tc>, window_params = [{transform_indices = @transform_0, window_bounds = array<i64: 1, 8, 512>}, {pipeline_mode = #tpu.pipeline_mode<synchronous>, transform_indices = @transform_1, window_bounds = array<i64: 512, 128>}, {pipeline_mode = #tpu.pipeline_mode<synchronous>, transform_indices = @transform_2, window_bounds = array<i64: 1, 128>}, {pipeline_mode = #tpu.pipeline_mode<synchronous>, transform_indices = @transform_3, window_bounds = array<i64: 8, 128>}, {pipeline_mode = #tpu.pipeline_mode<synchronous>, transform_indices = @transform_4, window_bounds = array<i64: 1, 128>}, {transform_indices = @transform_5, window_bounds = array<i64: 1, 1, 128>}, {transform_indices = @transform_6, window_bounds = array<i64: 1, 1, 128>}, {transform_indices = @transform_7, window_bounds = array<i64: 1, 128, 384>}, {transform_indices = @transform_8, window_bounds = array<i64: 1, 128, 128>}, {transform_indices = @transform_9, window_bounds = array<i64: 1, 1, 128>}, {transform_indices = @transform_10, window_bounds = array<i64: 1, 1, 128>}, {transform_indices = @transform_11, window_bounds = array<i64: 1, 1, 128>}, {transform_indices = @transform_12, window_bounds = array<i64: 1, 128, 256>}, {transform_indices = @transform_13, window_bounds = array<i64: 1, 1, 256>}, {transform_indices = @transform_14, window_bounds = array<i64: 1, 256, 128>}, {transform_indices = @transform_15, window_bounds = array<i64: 1, 1, 128>}, {pipeline_mode = #tpu.pipeline_mode<synchronous>, transform_indices = @transform_16, window_bounds = array<i64: 1, 128>}, {pipeline_mode = #tpu.pipeline_mode<synchronous>, transform_indices = @transform_17, window_bounds = array<i64: 1, 128>}, {transform_indices = @transform_18, window_bounds = array<i64: 1, 8, 128>}]} {
    %c0_i32 = arith.constant 0 : i32
    %0 = arith.cmpi eq, %arg1, %c0_i32 : i32
    %1 = arith.extui %0 : i1 to i32
    %c0_i32_0 = arith.constant 0 : i32
    %2 = arith.cmpi ne, %1, %c0_i32_0 : i32
    scf.if %2 {
      %c0_74 = arith.constant 0 : index
      %c0_75 = arith.constant 0 : index
      %c0_76 = arith.constant 0 : index
      %197 = vector.load %arg2[%c0_74, %c0_75, %c0_76] : memref<1x8x512xf32, #tpu.memory_space<vmem>>, vector<1x8x512xf32>
      %198 = vector.shape_cast %197 : vector<1x8x512xf32> to vector<8x512xf32>
      %199 = arith.truncf %198 : vector<8x512xf32> to vector<8x512xbf16>
      %c0_77 = arith.constant 0 : index
      %c0_78 = arith.constant 0 : index
      %200 = vector.load %arg3[%c0_77, %c0_78] : memref<512x128xf32, #tpu.memory_space<vmem>>, vector<512x128xf32>
      %201 = arith.truncf %200 : vector<512x128xf32> to vector<512x128xbf16>
      %cst_79 = arith.constant dense<0.000000e+00> : vector<8x128xf32>
      %202 = tpu.matmul %199, %201, %cst_79 {dimension_numbers = #tpu.dot_dimension_numbers<[1], [0], [0], [1], [0, 0, 1, 1], [], []>} : vector<8x512xbf16>, vector<512x128xbf16>, vector<8x128xf32> -> vector<8x128xf32>
      %c0_80 = arith.constant 0 : index
      %c0_81 = arith.constant 0 : index
      %203 = vector.load %arg4[%c0_80, %c0_81] : memref<1x128xf32, #tpu.memory_space<vmem>>, vector<1x128xf32>
      %204 = vector.broadcast %203 : vector<1x128xf32> to vector<8x128xf32>
      %205 = arith.addf %202, %204 : vector<8x128xf32>
      %c0_82 = arith.constant 0 : index
      %c0_83 = arith.constant 0 : index
      %206 = vector.load %arg5[%c0_82, %c0_83] : memref<8x128xf32, #tpu.memory_space<vmem>>, vector<8x128xf32>
      %207 = arith.addf %205, %206 : vector<8x128xf32>
      %cst_84 = arith.constant 0.000000e+00 : f32
      %208 = vector.broadcast %cst_84 : f32 to vector<16x128xf32>
      %c0_85 = arith.constant 0 : index
      %c0_86 = arith.constant 0 : index
      %209 = vector.load %arg21[%c0_85, %c0_86] : memref<16x128xf32, #tpu.memory_space<vmem>>, vector<16x128xf32>
      tpu.vector_store %arg21[%c0_85, %c0_86], %208 {strides = array<i32>} : memref<16x128xf32, #tpu.memory_space<vmem>>, vector<16x128xf32>,
      %c0_87 = arith.constant 0 : index
      %c0_88 = arith.constant 0 : index
      %210 = vector.load %arg6[%c0_87, %c0_88] : memref<1x128xf32, #tpu.memory_space<vmem>>, vector<1x128xf32>
      %c0_89 = arith.constant 0 : index
      %c0_90 = arith.constant 0 : index
      %211 = vector.load %arg21[%c0_89, %c0_90] : memref<16x128xf32, #tpu.memory_space<vmem>>, vector<1x128xf32>
      tpu.vector_store %arg21[%c0_89, %c0_90], %210 {strides = array<i32>} : memref<16x128xf32, #tpu.memory_space<vmem>>, vector<1x128xf32>,
      %c1 = arith.constant 1 : index
      %c0_91 = arith.constant 0 : index
      %212 = vector.load %arg21[%c1, %c0_91] : memref<16x128xf32, #tpu.memory_space<vmem>>, vector<8x128xf32>
      tpu.vector_store %arg21[%c1, %c0_91], %207 {strides = array<i32>} : memref<16x128xf32, #tpu.memory_space<vmem>>, vector<8x128xf32>,
    } else {
    }
    %c0 = arith.constant 0 : index
    %c0_1 = arith.constant 0 : index
    %3 = vector.load %arg21[%c0, %c0_1] : memref<16x128xf32, #tpu.memory_space<vmem>>, vector<16x128xf32>
    %c0_2 = arith.constant 0 : index
    %c0_3 = arith.constant 0 : index
    %c0_4 = arith.constant 0 : index
    %4 = vector.load %arg7[%c0_2, %c0_3, %c0_4] : memref<1x1x128xf32, #tpu.memory_space<vmem>>, vector<1x1x128xf32>
    %5 = vector.shape_cast %4 : vector<1x1x128xf32> to vector<1x128xf32>
    %c0_5 = arith.constant 0 : index
    %c0_6 = arith.constant 0 : index
    %c0_7 = arith.constant 0 : index
    %6 = vector.load %arg8[%c0_5, %c0_6, %c0_7] : memref<1x1x128xf32, #tpu.memory_space<vmem>>, vector<1x1x128xf32>
    %7 = vector.shape_cast %6 : vector<1x1x128xf32> to vector<1x128xf32>
    %cst = arith.constant dense<0.000000e+00> : vector<16xf32>
    %8 = vector.multi_reduction <add>, %3, %cst [1] : vector<16x128xf32> to vector<16xf32>
    %9 = vector.shape_cast %8 : vector<16xf32> to vector<16x1xf32>
    %cst_8 = arith.constant 1.280000e+02 : f32
    %10 = vector.broadcast %cst_8 : f32 to vector<16x1xf32>
    %11 = arith.divf %9, %10 : vector<16x1xf32>
    %12 = vector.broadcast %11 : vector<16x1xf32> to vector<16x128xf32>
    %13 = arith.subf %3, %12 : vector<16x128xf32>
    %14 = arith.mulf %13, %13 : vector<16x128xf32>
    %cst_9 = arith.constant dense<0.000000e+00> : vector<16xf32>
    %15 = vector.multi_reduction <add>, %14, %cst_9 [1] : vector<16x128xf32> to vector<16xf32>
    %16 = vector.shape_cast %15 : vector<16xf32> to vector<16x1xf32>
    %cst_10 = arith.constant 1.280000e+02 : f32
    %17 = vector.broadcast %cst_10 : f32 to vector<16x1xf32>
    %18 = arith.divf %16, %17 : vector<16x1xf32>
    %19 = vector.broadcast %11 : vector<16x1xf32> to vector<16x128xf32>
    %20 = arith.subf %3, %19 : vector<16x128xf32>
    %cst_11 = arith.constant 9.99999974E-6 : f32
    %21 = vector.broadcast %cst_11 : f32 to vector<16x1xf32>
    %22 = arith.addf %18, %21 : vector<16x1xf32>
    %23 = math.rsqrt %22 : vector<16x1xf32>
    %24 = vector.broadcast %23 : vector<16x1xf32> to vector<16x128xf32>
    %25 = arith.mulf %20, %24 : vector<16x128xf32>
    %26 = vector.broadcast %5 : vector<1x128xf32> to vector<16x128xf32>
    %27 = arith.mulf %25, %26 : vector<16x128xf32>
    %28 = vector.broadcast %7 : vector<1x128xf32> to vector<16x128xf32>
    %29 = arith.addf %27, %28 : vector<16x128xf32>
    %30 = arith.truncf %29 : vector<16x128xf32> to vector<16x128xbf16>
    %c0_12 = arith.constant 0 : index
    %c0_13 = arith.constant 0 : index
    %c0_14 = arith.constant 0 : index
    %31 = vector.load %arg9[%c0_12, %c0_13, %c0_14] : memref<1x128x384xf32, #tpu.memory_space<vmem>>, vector<1x128x384xf32>
    %32 = vector.shape_cast %31 : vector<1x128x384xf32> to vector<128x384xf32>
    %33 = arith.truncf %32 : vector<128x384xf32> to vector<128x384xbf16>
    %cst_15 = arith.constant dense<0.000000e+00> : vector<16x384xf32>
    %34 = tpu.matmul %30, %33, %cst_15 {dimension_numbers = #tpu.dot_dimension_numbers<[1], [0], [0], [1], [0, 0, 1, 1], [], []>} : vector<16x128xbf16>, vector<128x384xbf16>, vector<16x384xf32> -> vector<16x384xf32>
    %35 = vector.extract_strided_slice %34 {offsets = [0, 0], sizes = [16, 32], strides = [1, 1]} : vector<16x384xf32> to vector<16x32xf32>
    %36 = arith.truncf %35 : vector<16x32xf32> to vector<16x32xbf16>
    %37 = vector.extract_strided_slice %34 {offsets = [0, 128], sizes = [16, 32], strides = [1, 1]} : vector<16x384xf32> to vector<16x32xf32>
    %38 = arith.truncf %37 : vector<16x32xf32> to vector<16x32xbf16>
    %cst_16 = arith.constant dense<0.000000e+00> : vector<16x16xf32>
    %39 = tpu.matmul %36, %38, %cst_16 {dimension_numbers = #tpu.dot_dimension_numbers<[1], [1], [0], [0], [0, 0, 1, 0], [], []>} : vector<16x32xbf16>, vector<16x32xbf16>, vector<16x16xf32> -> vector<16x16xf32>
    %40 = vector.extract_strided_slice %34 {offsets = [0, 32], sizes = [16, 32], strides = [1, 1]} : vector<16x384xf32> to vector<16x32xf32>
    %41 = arith.truncf %40 : vector<16x32xf32> to vector<16x32xbf16>
    %42 = vector.extract_strided_slice %34 {offsets = [0, 160], sizes = [16, 32], strides = [1, 1]} : vector<16x384xf32> to vector<16x32xf32>
    %43 = arith.truncf %42 : vector<16x32xf32> to vector<16x32xbf16>
    %cst_17 = arith.constant dense<0.000000e+00> : vector<16x16xf32>
    %44 = tpu.matmul %41, %43, %cst_17 {dimension_numbers = #tpu.dot_dimension_numbers<[1], [1], [0], [0], [0, 0, 1, 0], [], []>} : vector<16x32xbf16>, vector<16x32xbf16>, vector<16x16xf32> -> vector<16x16xf32>
    %45 = vector.extract_strided_slice %34 {offsets = [0, 64], sizes = [16, 32], strides = [1, 1]} : vector<16x384xf32> to vector<16x32xf32>
    %46 = arith.truncf %45 : vector<16x32xf32> to vector<16x32xbf16>
    %47 = vector.extract_strided_slice %34 {offsets = [0, 192], sizes = [16, 32], strides = [1, 1]} : vector<16x384xf32> to vector<16x32xf32>
    %48 = arith.truncf %47 : vector<16x32xf32> to vector<16x32xbf16>
    %cst_18 = arith.constant dense<0.000000e+00> : vector<16x16xf32>
    %49 = tpu.matmul %46, %48, %cst_18 {dimension_numbers = #tpu.dot_dimension_numbers<[1], [1], [0], [0], [0, 0, 1, 0], [], []>} : vector<16x32xbf16>, vector<16x32xbf16>, vector<16x16xf32> -> vector<16x16xf32>
    %50 = vector.extract_strided_slice %34 {offsets = [0, 96], sizes = [16, 32], strides = [1, 1]} : vector<16x384xf32> to vector<16x32xf32>
    %51 = arith.truncf %50 : vector<16x32xf32> to vector<16x32xbf16>
    %52 = vector.extract_strided_slice %34 {offsets = [0, 224], sizes = [16, 32], strides = [1, 1]} : vector<16x384xf32> to vector<16x32xf32>
    %53 = arith.truncf %52 : vector<16x32xf32> to vector<16x32xbf16>
    %cst_19 = arith.constant dense<0.000000e+00> : vector<16x16xf32>
    %54 = tpu.matmul %51, %53, %cst_19 {dimension_numbers = #tpu.dot_dimension_numbers<[1], [1], [0], [0], [0, 0, 1, 0], [], []>} : vector<16x32xbf16>, vector<16x32xbf16>, vector<16x16xf32> -> vector<16x16xf32>
    %55 = tpu.concatenate %39, %44, %49, %54 in 1 : vector<16x16xf32>, vector<16x16xf32>, vector<16x16xf32>, vector<16x16xf32> -> vector<16x64xf32>
    %cst_20 = arith.constant 0.176776692 : f32
    %56 = vector.broadcast %cst_20 : f32 to vector<16x64xf32>
    %57 = arith.mulf %55, %56 : vector<16x64xf32>
    %58 = tpu.iota {dimensions = array<i32: 1>} : vector<1x16xi32>
    %c9_i32 = arith.constant 9 : i32
    %59 = vector.broadcast %c9_i32 : i32 to vector<1x16xi32>
    %60 = arith.cmpi slt, %58, %59 : vector<1x16xi32>
    %cst_21 = arith.constant 0.000000e+00 : f32
    %cst_22 = arith.constant -1.000000e+30 : f32
    %61 = vector.broadcast %cst_21 : f32 to vector<1x16xf32>
    %62 = vector.broadcast %cst_22 : f32 to vector<1x16xf32>
    %63 = arith.select %60, %61, %62 : vector<1x16xi1>, vector<1x16xf32>
    %64 = tpu.concatenate %63, %63, %63, %63 in 1 : vector<1x16xf32>, vector<1x16xf32>, vector<1x16xf32>, vector<1x16xf32> -> vector<1x64xf32>
    %65 = vector.broadcast %64 : vector<1x64xf32> to vector<16x64xf32>
    %66 = arith.addf %57, %65 : vector<16x64xf32>
    %cst_23 = arith.constant dense<0xFF800000> : vector<16xf32>
    %67 = vector.multi_reduction <maximumf>, %66, %cst_23 [1] : vector<16x64xf32> to vector<16xf32>
    %68 = vector.shape_cast %67 : vector<16xf32> to vector<16x1xf32>
    %69 = vector.broadcast %68 : vector<16x1xf32> to vector<16x64xf32>
    %70 = arith.subf %66, %69 : vector<16x64xf32>
    %71 = math.exp %70 : vector<16x64xf32>
    %c0_24 = arith.constant 0 : index
    %c0_25 = arith.constant 0 : index
    %c0_26 = arith.constant 0 : index
    %72 = vector.load %arg10[%c0_24, %c0_25, %c0_26] : memref<1x128x128xf32, #tpu.memory_space<vmem>>, vector<1x128x128xf32>
    %73 = vector.shape_cast %72 : vector<1x128x128xf32> to vector<128x128xf32>
    %cst_27 = arith.constant 0.000000e+00 : f32
    %74 = vector.broadcast %cst_27 : f32 to vector<16x128xf32>
    %75 = vector.extract_strided_slice %71 {offsets = [0, 0], sizes = [16, 16], strides = [1, 1]} : vector<16x64xf32> to vector<16x16xf32>
    %cst_28 = arith.constant dense<0.000000e+00> : vector<16xf32>
    %76 = vector.multi_reduction <add>, %75, %cst_28 [1] : vector<16x16xf32> to vector<16xf32>
    %77 = vector.shape_cast %76 : vector<16xf32> to vector<16x1xf32>
    %78 = tpu.reciprocal %77 {approx = true} : vector<16x1xf32> -> vector<16x1xf32>
    %79 = vector.broadcast %78 : vector<16x1xf32> to vector<16x16xf32>
    %80 = arith.mulf %75, %79 : vector<16x16xf32>
    %81 = vector.extract_strided_slice %34 {offsets = [0, 256], sizes = [16, 32], strides = [1, 1]} : vector<16x384xf32> to vector<16x32xf32>
    %82 = arith.truncf %81 : vector<16x32xf32> to vector<16x32xbf16>
    %83 = arith.truncf %80 : vector<16x16xf32> to vector<16x16xbf16>
    %cst_29 = arith.constant dense<0.000000e+00> : vector<16x32xf32>
    %84 = tpu.matmul %83, %82, %cst_29 {dimension_numbers = #tpu.dot_dimension_numbers<[1], [0], [0], [1], [0, 0, 1, 1], [], []>} : vector<16x16xbf16>, vector<16x32xbf16>, vector<16x32xf32> -> vector<16x32xf32>
    %85 = arith.truncf %84 : vector<16x32xf32> to vector<16x32xbf16>
    %86 = vector.extract_strided_slice %73 {offsets = [0, 0], sizes = [32, 128], strides = [1, 1]} : vector<128x128xf32> to vector<32x128xf32>
    %87 = arith.truncf %86 : vector<32x128xf32> to vector<32x128xbf16>
    %cst_30 = arith.constant dense<0.000000e+00> : vector<16x128xf32>
    %88 = tpu.matmul %85, %87, %cst_30 {dimension_numbers = #tpu.dot_dimension_numbers<[1], [0], [0], [1], [0, 0, 1, 1], [], []>} : vector<16x32xbf16>, vector<32x128xbf16>, vector<16x128xf32> -> vector<16x128xf32>
    %89 = arith.addf %74, %88 : vector<16x128xf32>
    %90 = vector.extract_strided_slice %71 {offsets = [0, 16], sizes = [16, 16], strides = [1, 1]} : vector<16x64xf32> to vector<16x16xf32>
    %cst_31 = arith.constant dense<0.000000e+00> : vector<16xf32>
    %91 = vector.multi_reduction <add>, %90, %cst_31 [1] : vector<16x16xf32> to vector<16xf32>
    %92 = vector.shape_cast %91 : vector<16xf32> to vector<16x1xf32>
    %93 = tpu.reciprocal %92 {approx = true} : vector<16x1xf32> -> vector<16x1xf32>
    %94 = vector.broadcast %93 : vector<16x1xf32> to vector<16x16xf32>
    %95 = arith.mulf %90, %94 : vector<16x16xf32>
    %96 = vector.extract_strided_slice %34 {offsets = [0, 288], sizes = [16, 32], strides = [1, 1]} : vector<16x384xf32> to vector<16x32xf32>
    %97 = arith.truncf %96 : vector<16x32xf32> to vector<16x32xbf16>
    %98 = arith.truncf %95 : vector<16x16xf32> to vector<16x16xbf16>
    %cst_32 = arith.constant dense<0.000000e+00> : vector<16x32xf32>
    %99 = tpu.matmul %98, %97, %cst_32 {dimension_numbers = #tpu.dot_dimension_numbers<[1], [0], [0], [1], [0, 0, 1, 1], [], []>} : vector<16x16xbf16>, vector<16x32xbf16>, vector<16x32xf32> -> vector<16x32xf32>
    %100 = arith.truncf %99 : vector<16x32xf32> to vector<16x32xbf16>
    %101 = vector.extract_strided_slice %73 {offsets = [32, 0], sizes = [32, 128], strides = [1, 1]} : vector<128x128xf32> to vector<32x128xf32>
    %102 = arith.truncf %101 : vector<32x128xf32> to vector<32x128xbf16>
    %cst_33 = arith.constant dense<0.000000e+00> : vector<16x128xf32>
    %103 = tpu.matmul %100, %102, %cst_33 {dimension_numbers = #tpu.dot_dimension_numbers<[1], [0], [0], [1], [0, 0, 1, 1], [], []>} : vector<16x32xbf16>, vector<32x128xbf16>, vector<16x128xf32> -> vector<16x128xf32>
    %104 = arith.addf %89, %103 : vector<16x128xf32>
    %105 = vector.extract_strided_slice %71 {offsets = [0, 32], sizes = [16, 16], strides = [1, 1]} : vector<16x64xf32> to vector<16x16xf32>
    %cst_34 = arith.constant dense<0.000000e+00> : vector<16xf32>
    %106 = vector.multi_reduction <add>, %105, %cst_34 [1] : vector<16x16xf32> to vector<16xf32>
    %107 = vector.shape_cast %106 : vector<16xf32> to vector<16x1xf32>
    %108 = tpu.reciprocal %107 {approx = true} : vector<16x1xf32> -> vector<16x1xf32>
    %109 = vector.broadcast %108 : vector<16x1xf32> to vector<16x16xf32>
    %110 = arith.mulf %105, %109 : vector<16x16xf32>
    %111 = vector.extract_strided_slice %34 {offsets = [0, 320], sizes = [16, 32], strides = [1, 1]} : vector<16x384xf32> to vector<16x32xf32>
    %112 = arith.truncf %111 : vector<16x32xf32> to vector<16x32xbf16>
    %113 = arith.truncf %110 : vector<16x16xf32> to vector<16x16xbf16>
    %cst_35 = arith.constant dense<0.000000e+00> : vector<16x32xf32>
    %114 = tpu.matmul %113, %112, %cst_35 {dimension_numbers = #tpu.dot_dimension_numbers<[1], [0], [0], [1], [0, 0, 1, 1], [], []>} : vector<16x16xbf16>, vector<16x32xbf16>, vector<16x32xf32> -> vector<16x32xf32>
    %115 = arith.truncf %114 : vector<16x32xf32> to vector<16x32xbf16>
    %116 = vector.extract_strided_slice %73 {offsets = [64, 0], sizes = [32, 128], strides = [1, 1]} : vector<128x128xf32> to vector<32x128xf32>
    %117 = arith.truncf %116 : vector<32x128xf32> to vector<32x128xbf16>
    %cst_36 = arith.constant dense<0.000000e+00> : vector<16x128xf32>
    %118 = tpu.matmul %115, %117, %cst_36 {dimension_numbers = #tpu.dot_dimension_numbers<[1], [0], [0], [1], [0, 0, 1, 1], [], []>} : vector<16x32xbf16>, vector<32x128xbf16>, vector<16x128xf32> -> vector<16x128xf32>
    %119 = arith.addf %104, %118 : vector<16x128xf32>
    %120 = vector.extract_strided_slice %71 {offsets = [0, 48], sizes = [16, 16], strides = [1, 1]} : vector<16x64xf32> to vector<16x16xf32>
    %cst_37 = arith.constant dense<0.000000e+00> : vector<16xf32>
    %121 = vector.multi_reduction <add>, %120, %cst_37 [1] : vector<16x16xf32> to vector<16xf32>
    %122 = vector.shape_cast %121 : vector<16xf32> to vector<16x1xf32>
    %123 = tpu.reciprocal %122 {approx = true} : vector<16x1xf32> -> vector<16x1xf32>
    %124 = vector.broadcast %123 : vector<16x1xf32> to vector<16x16xf32>
    %125 = arith.mulf %120, %124 : vector<16x16xf32>
    %126 = vector.extract_strided_slice %34 {offsets = [0, 352], sizes = [16, 32], strides = [1, 1]} : vector<16x384xf32> to vector<16x32xf32>
    %127 = arith.truncf %126 : vector<16x32xf32> to vector<16x32xbf16>
    %128 = arith.truncf %125 : vector<16x16xf32> to vector<16x16xbf16>
    %cst_38 = arith.constant dense<0.000000e+00> : vector<16x32xf32>
    %129 = tpu.matmul %128, %127, %cst_38 {dimension_numbers = #tpu.dot_dimension_numbers<[1], [0], [0], [1], [0, 0, 1, 1], [], []>} : vector<16x16xbf16>, vector<16x32xbf16>, vector<16x32xf32> -> vector<16x32xf32>
    %130 = arith.truncf %129 : vector<16x32xf32> to vector<16x32xbf16>
    %131 = vector.extract_strided_slice %73 {offsets = [96, 0], sizes = [32, 128], strides = [1, 1]} : vector<128x128xf32> to vector<32x128xf32>
    %132 = arith.truncf %131 : vector<32x128xf32> to vector<32x128xbf16>
    %cst_39 = arith.constant dense<0.000000e+00> : vector<16x128xf32>
    %133 = tpu.matmul %130, %132, %cst_39 {dimension_numbers = #tpu.dot_dimension_numbers<[1], [0], [0], [1], [0, 0, 1, 1], [], []>} : vector<16x32xbf16>, vector<32x128xbf16>, vector<16x128xf32> -> vector<16x128xf32>
    %134 = arith.addf %119, %133 : vector<16x128xf32>
    %135 = arith.addf %3, %134 : vector<16x128xf32>
    %c0_40 = arith.constant 0 : index
    %c0_41 = arith.constant 0 : index
    %c0_42 = arith.constant 0 : index
    %136 = vector.load %arg11[%c0_40, %c0_41, %c0_42] : memref<1x1x128xf32, #tpu.memory_space<vmem>>, vector<1x1x128xf32>
    %137 = vector.shape_cast %136 : vector<1x1x128xf32> to vector<1x128xf32>
    %138 = vector.broadcast %137 : vector<1x128xf32> to vector<16x128xf32>
    %139 = arith.addf %135, %138 : vector<16x128xf32>
    %c0_43 = arith.constant 0 : index
    %c0_44 = arith.constant 0 : index
    %c0_45 = arith.constant 0 : index
    %140 = vector.load %arg12[%c0_43, %c0_44, %c0_45] : memref<1x1x128xf32, #tpu.memory_space<vmem>>, vector<1x1x128xf32>
    %141 = vector.shape_cast %140 : vector<1x1x128xf32> to vector<1x128xf32>
    %c0_46 = arith.constant 0 : index
    %c0_47 = arith.constant 0 : index
    %c0_48 = arith.constant 0 : index
    %142 = vector.load %arg13[%c0_46, %c0_47, %c0_48] : memref<1x1x128xf32, #tpu.memory_space<vmem>>, vector<1x1x128xf32>
    %143 = vector.shape_cast %142 : vector<1x1x128xf32> to vector<1x128xf32>
    %cst_49 = arith.constant dense<0.000000e+00> : vector<16xf32>
    %144 = vector.multi_reduction <add>, %139, %cst_49 [1] : vector<16x128xf32> to vector<16xf32>
    %145 = vector.shape_cast %144 : vector<16xf32> to vector<16x1xf32>
    %cst_50 = arith.constant 1.280000e+02 : f32
    %146 = vector.broadcast %cst_50 : f32 to vector<16x1xf32>
    %147 = arith.divf %145, %146 : vector<16x1xf32>
    %148 = vector.broadcast %147 : vector<16x1xf32> to vector<16x128xf32>
    %149 = arith.subf %139, %148 : vector<16x128xf32>
    %150 = arith.mulf %149, %149 : vector<16x128xf32>
    %cst_51 = arith.constant dense<0.000000e+00> : vector<16xf32>
    %151 = vector.multi_reduction <add>, %150, %cst_51 [1] : vector<16x128xf32> to vector<16xf32>
    %152 = vector.shape_cast %151 : vector<16xf32> to vector<16x1xf32>
    %cst_52 = arith.constant 1.280000e+02 : f32
    %153 = vector.broadcast %cst_52 : f32 to vector<16x1xf32>
    %154 = arith.divf %152, %153 : vector<16x1xf32>
    %155 = vector.broadcast %147 : vector<16x1xf32> to vector<16x128xf32>
    %156 = arith.subf %139, %155 : vector<16x128xf32>
    %cst_53 = arith.constant 9.99999974E-6 : f32
    %157 = vector.broadcast %cst_53 : f32 to vector<16x1xf32>
    %158 = arith.addf %154, %157 : vector<16x1xf32>
    %159 = math.rsqrt %158 : vector<16x1xf32>
    %160 = vector.broadcast %159 : vector<16x1xf32> to vector<16x128xf32>
    %161 = arith.mulf %156, %160 : vector<16x128xf32>
    %162 = vector.broadcast %141 : vector<1x128xf32> to vector<16x128xf32>
    %163 = arith.mulf %161, %162 : vector<16x128xf32>
    %164 = vector.broadcast %143 : vector<1x128xf32> to vector<16x128xf32>
    %165 = arith.addf %163, %164 : vector<16x128xf32>
    %166 = arith.truncf %165 : vector<16x128xf32> to vector<16x128xbf16>
    %c0_54 = arith.constant 0 : index
    %c0_55 = arith.constant 0 : index
    %c0_56 = arith.constant 0 : index
    %167 = vector.load %arg14[%c0_54, %c0_55, %c0_56] : memref<1x128x256xf32, #tpu.memory_space<vmem>>, vector<1x128x256xf32>
    %168 = vector.shape_cast %167 : vector<1x128x256xf32> to vector<128x256xf32>
    %169 = arith.truncf %168 : vector<128x256xf32> to vector<128x256xbf16>
    %cst_57 = arith.constant dense<0.000000e+00> : vector<16x256xf32>
    %170 = tpu.matmul %166, %169, %cst_57 {dimension_numbers = #tpu.dot_dimension_numbers<[1], [0], [0], [1], [0, 0, 1, 1], [], []>} : vector<16x128xbf16>, vector<128x256xbf16>, vector<16x256xf32> -> vector<16x256xf32>
    %c0_58 = arith.constant 0 : index
    %c0_59 = arith.constant 0 : index
    %c0_60 = arith.constant 0 : index
    %171 = vector.load %arg15[%c0_58, %c0_59, %c0_60] : memref<1x1x256xf32, #tpu.memory_space<vmem>>, vector<1x1x256xf32>
    %172 = vector.shape_cast %171 : vector<1x1x256xf32> to vector<1x256xf32>
    %173 = vector.broadcast %172 : vector<1x256xf32> to vector<16x256xf32>
    %174 = arith.addf %170, %173 : vector<16x256xf32>
    %cst_61 = arith.constant 5.000000e-01 : f32
    %175 = vector.broadcast %cst_61 : f32 to vector<16x256xf32>
    %176 = arith.mulf %175, %174 : vector<16x256xf32>
    %cst_62 = arith.constant 0.707106769 : f32
    %177 = vector.broadcast %cst_62 : f32 to vector<16x256xf32>
    %178 = arith.mulf %174, %177 : vector<16x256xf32>
    %179 = math.erf %178 : vector<16x256xf32>
    %cst_63 = arith.constant 1.000000e+00 : f32
    %180 = vector.broadcast %cst_63 : f32 to vector<16x256xf32>
    %181 = arith.addf %180, %179 : vector<16x256xf32>
    %182 = arith.mulf %176, %181 : vector<16x256xf32>
    %183 = arith.truncf %182 : vector<16x256xf32> to vector<16x256xbf16>
    %c0_64 = arith.constant 0 : index
    %c0_65 = arith.constant 0 : index
    %c0_66 = arith.constant 0 : index
    %184 = vector.load %arg16[%c0_64, %c0_65, %c0_66] : memref<1x256x128xf32, #tpu.memory_space<vmem>>, vector<1x256x128xf32>
    %185 = vector.shape_cast %184 : vector<1x256x128xf32> to vector<256x128xf32>
    %186 = arith.truncf %185 : vector<256x128xf32> to vector<256x128xbf16>
    %cst_67 = arith.constant dense<0.000000e+00> : vector<16x128xf32>
    %187 = tpu.matmul %183, %186, %cst_67 {dimension_numbers = #tpu.dot_dimension_numbers<[1], [0], [0], [1], [0, 0, 1, 1], [], []>} : vector<16x256xbf16>, vector<256x128xbf16>, vector<16x128xf32> -> vector<16x128xf32>
    %c0_68 = arith.constant 0 : index
    %c0_69 = arith.constant 0 : index
    %c0_70 = arith.constant 0 : index
    %188 = vector.load %arg17[%c0_68, %c0_69, %c0_70] : memref<1x1x128xf32, #tpu.memory_space<vmem>>, vector<1x1x128xf32>
    %189 = vector.shape_cast %188 : vector<1x1x128xf32> to vector<1x128xf32>
    %190 = vector.broadcast %189 : vector<1x128xf32> to vector<16x128xf32>
    %191 = arith.addf %187, %190 : vector<16x128xf32>
    %192 = arith.addf %139, %191 : vector<16x128xf32>
    %c0_71 = arith.constant 0 : index
    %c0_72 = arith.constant 0 : index
    %193 = vector.load %arg21[%c0_71, %c0_72] : memref<16x128xf32, #tpu.memory_space<vmem>>, vector<16x128xf32>
    tpu.vector_store %arg21[%c0_71, %c0_72], %192 {strides = array<i32>} : memref<16x128xf32, #tpu.memory_space<vmem>>, vector<16x128xf32>,
    %c1_i32 = arith.constant 1 : i32
    %194 = arith.cmpi eq, %arg1, %c1_i32 : i32
    %195 = arith.extui %194 : i1 to i32
    %c0_i32_73 = arith.constant 0 : i32
    %196 = arith.cmpi ne, %195, %c0_i32_73 : i32
    scf.if %196 {
      %197 = vector.extract_strided_slice %192 {offsets = [1, 0], sizes = [8, 128], strides = [1, 1]} : vector<16x128xf32> to vector<8x128xf32>
      %c0_74 = arith.constant 0 : index
      %c0_75 = arith.constant 0 : index
      %198 = vector.load %arg18[%c0_74, %c0_75] : memref<1x128xf32, #tpu.memory_space<vmem>>, vector<1x128xf32>
      %c0_76 = arith.constant 0 : index
      %c0_77 = arith.constant 0 : index
      %199 = vector.load %arg19[%c0_76, %c0_77] : memref<1x128xf32, #tpu.memory_space<vmem>>, vector<1x128xf32>
      %cst_78 = arith.constant dense<0.000000e+00> : vector<8xf32>
      %200 = vector.multi_reduction <add>, %197, %cst_78 [1] : vector<8x128xf32> to vector<8xf32>
      %201 = vector.shape_cast %200 : vector<8xf32> to vector<8x1xf32>
      %cst_79 = arith.constant 1.280000e+02 : f32
      %202 = vector.broadcast %cst_79 : f32 to vector<8x1xf32>
      %203 = arith.divf %201, %202 : vector<8x1xf32>
      %204 = vector.broadcast %203 : vector<8x1xf32> to vector<8x128xf32>
      %205 = arith.subf %197, %204 : vector<8x128xf32>
      %206 = arith.mulf %205, %205 : vector<8x128xf32>
      %cst_80 = arith.constant dense<0.000000e+00> : vector<8xf32>
      %207 = vector.multi_reduction <add>, %206, %cst_80 [1] : vector<8x128xf32> to vector<8xf32>
      %208 = vector.shape_cast %207 : vector<8xf32> to vector<8x1xf32>
      %cst_81 = arith.constant 1.280000e+02 : f32
      %209 = vector.broadcast %cst_81 : f32 to vector<8x1xf32>
      %210 = arith.divf %208, %209 : vector<8x1xf32>
      %211 = vector.broadcast %203 : vector<8x1xf32> to vector<8x128xf32>
      %212 = arith.subf %197, %211 : vector<8x128xf32>
      %cst_82 = arith.constant 9.99999974E-6 : f32
      %213 = vector.broadcast %cst_82 : f32 to vector<8x1xf32>
      %214 = arith.addf %210, %213 : vector<8x1xf32>
      %215 = math.rsqrt %214 : vector<8x1xf32>
      %216 = vector.broadcast %215 : vector<8x1xf32> to vector<8x128xf32>
      %217 = arith.mulf %212, %216 : vector<8x128xf32>
      %218 = vector.broadcast %198 : vector<1x128xf32> to vector<8x128xf32>
      %219 = arith.mulf %217, %218 : vector<8x128xf32>
      %220 = vector.broadcast %199 : vector<1x128xf32> to vector<8x128xf32>
      %221 = arith.addf %219, %220 : vector<8x128xf32>
      %c0_83 = arith.constant 0 : index
      %c0_84 = arith.constant 0 : index
      %c0_85 = arith.constant 0 : index
      %222 = vector.load %arg20[%c0_83, %c0_84, %c0_85] : memref<1x8x128xf32, #tpu.memory_space<vmem>>, vector<1x8x128xf32>
      %223 = vector.shape_cast %222 : vector<1x8x128xf32> to vector<8x128xf32>
      %224 = vector.shape_cast %221 : vector<8x128xf32> to vector<1x8x128xf32>
      tpu.vector_store %arg20[%c0_83, %c0_84, %c0_85], %224 {strides = array<i32>} : memref<1x8x128xf32, #tpu.memory_space<vmem>>, vector<1x8x128xf32>,
    } else {
    }
    return
  }
  func.func @transform_0(%arg0: i32, %arg1: i32) -> (i32, i32, i32) {
    %c0_i32 = arith.constant 0 : i32
    %c0_i32_0 = arith.constant 0 : i32
    %c0_i32_1 = arith.constant 0 : i32
    return %arg0, %c0_i32, %c0_i32_0 : i32, i32, i32
  }
  func.func @transform_1(%arg0: i32, %arg1: i32) -> (i32, i32) {
    %c0_i32 = arith.constant 0 : i32
    %c0_i32_0 = arith.constant 0 : i32
    %c0_i32_1 = arith.constant 0 : i32
    return %c0_i32, %c0_i32_0 : i32, i32
  }
  func.func @transform_2(%arg0: i32, %arg1: i32) -> (i32, i32) {
    %c0_i32 = arith.constant 0 : i32
    %c0_i32_0 = arith.constant 0 : i32
    %c0_i32_1 = arith.constant 0 : i32
    return %c0_i32, %c0_i32_0 : i32, i32
  }
  func.func @transform_3(%arg0: i32, %arg1: i32) -> (i32, i32) {
    %c0_i32 = arith.constant 0 : i32
    %c0_i32_0 = arith.constant 0 : i32
    %c0_i32_1 = arith.constant 0 : i32
    return %c0_i32, %c0_i32_0 : i32, i32
  }
  func.func @transform_4(%arg0: i32, %arg1: i32) -> (i32, i32) {
    %c0_i32 = arith.constant 0 : i32
    %c0_i32_0 = arith.constant 0 : i32
    %c0_i32_1 = arith.constant 0 : i32
    return %c0_i32, %c0_i32_0 : i32, i32
  }
  func.func @transform_5(%arg0: i32, %arg1: i32) -> (i32, i32, i32) {
    %c0_i32 = arith.constant 0 : i32
    %c0_i32_0 = arith.constant 0 : i32
    %c0_i32_1 = arith.constant 0 : i32
    return %arg1, %c0_i32, %c0_i32_0 : i32, i32, i32
  }
  func.func @transform_6(%arg0: i32, %arg1: i32) -> (i32, i32, i32) {
    %c0_i32 = arith.constant 0 : i32
    %c0_i32_0 = arith.constant 0 : i32
    %c0_i32_1 = arith.constant 0 : i32
    return %arg1, %c0_i32, %c0_i32_0 : i32, i32, i32
  }
  func.func @transform_7(%arg0: i32, %arg1: i32) -> (i32, i32, i32) {
    %c0_i32 = arith.constant 0 : i32
    %c0_i32_0 = arith.constant 0 : i32
    %c0_i32_1 = arith.constant 0 : i32
    return %arg1, %c0_i32, %c0_i32_0 : i32, i32, i32
  }
  func.func @transform_8(%arg0: i32, %arg1: i32) -> (i32, i32, i32) {
    %c0_i32 = arith.constant 0 : i32
    %c0_i32_0 = arith.constant 0 : i32
    %c0_i32_1 = arith.constant 0 : i32
    return %arg1, %c0_i32, %c0_i32_0 : i32, i32, i32
  }
  func.func @transform_9(%arg0: i32, %arg1: i32) -> (i32, i32, i32) {
    %c0_i32 = arith.constant 0 : i32
    %c0_i32_0 = arith.constant 0 : i32
    %c0_i32_1 = arith.constant 0 : i32
    return %arg1, %c0_i32, %c0_i32_0 : i32, i32, i32
  }
  func.func @transform_10(%arg0: i32, %arg1: i32) -> (i32, i32, i32) {
    %c0_i32 = arith.constant 0 : i32
    %c0_i32_0 = arith.constant 0 : i32
    %c0_i32_1 = arith.constant 0 : i32
    return %arg1, %c0_i32, %c0_i32_0 : i32, i32, i32
  }
  func.func @transform_11(%arg0: i32, %arg1: i32) -> (i32, i32, i32) {
    %c0_i32 = arith.constant 0 : i32
    %c0_i32_0 = arith.constant 0 : i32
    %c0_i32_1 = arith.constant 0 : i32
    return %arg1, %c0_i32, %c0_i32_0 : i32, i32, i32
  }
  func.func @transform_12(%arg0: i32, %arg1: i32) -> (i32, i32, i32) {
    %c0_i32 = arith.constant 0 : i32
    %c0_i32_0 = arith.constant 0 : i32
    %c0_i32_1 = arith.constant 0 : i32
    return %arg1, %c0_i32, %c0_i32_0 : i32, i32, i32
  }
  func.func @transform_13(%arg0: i32, %arg1: i32) -> (i32, i32, i32) {
    %c0_i32 = arith.constant 0 : i32
    %c0_i32_0 = arith.constant 0 : i32
    %c0_i32_1 = arith.constant 0 : i32
    return %arg1, %c0_i32, %c0_i32_0 : i32, i32, i32
  }
  func.func @transform_14(%arg0: i32, %arg1: i32) -> (i32, i32, i32) {
    %c0_i32 = arith.constant 0 : i32
    %c0_i32_0 = arith.constant 0 : i32
    %c0_i32_1 = arith.constant 0 : i32
    return %arg1, %c0_i32, %c0_i32_0 : i32, i32, i32
  }
  func.func @transform_15(%arg0: i32, %arg1: i32) -> (i32, i32, i32) {
    %c0_i32 = arith.constant 0 : i32
    %c0_i32_0 = arith.constant 0 : i32
    %c0_i32_1 = arith.constant 0 : i32
    return %arg1, %c0_i32, %c0_i32_0 : i32, i32, i32
  }
  func.func @transform_16(%arg0: i32, %arg1: i32) -> (i32, i32) {
    %c0_i32 = arith.constant 0 : i32
    %c0_i32_0 = arith.constant 0 : i32
    %c0_i32_1 = arith.constant 0 : i32
    return %c0_i32, %c0_i32_0 : i32, i32
  }
  func.func @transform_17(%arg0: i32, %arg1: i32) -> (i32, i32) {
    %c0_i32 = arith.constant 0 : i32
    %c0_i32_0 = arith.constant 0 : i32
    %c0_i32_1 = arith.constant 0 : i32
    return %c0_i32, %c0_i32_0 : i32, i32
  }
  func.func @transform_18(%arg0: i32, %arg1: i32) -> (i32, i32, i32) {
    %c0_i32 = arith.constant 0 : i32
    %c0_i32_0 = arith.constant 0 : i32
    %c0_i32_1 = arith.constant 0 : i32
    return %arg0, %c0_i32, %c0_i32_0 : i32, i32, i32
  }
}

</mosaic_0001>

<llo_original>
// kernel: _lambda_.1
$region0: #{_lambda_.1}
  #allocation0 [shape = 'u32[]', space=smem, size = 0x4, offset = 0x4, fixed_abs, tag = 'smem constant byte address 0x4 - core index']
  #allocation1 [shape = 'u32[144,128]{1,0:T(1,128)}', space=vmem, size = 0x12000, scoped, tag = 'internal scratch']
  #allocation2 [shape = 'f32[16,128]{1,0:T(8,128)}', space=vmem, size = 0x2000, scoped, tag = 'scratch operand']
  %s0 = inlined_call_operand.vmem [shape: f32[2,8,512], index: 0, kind: input, shape index: {}]
  %s1 = inlined_call_operand.vmem [shape: f32[512,128], index: 1, kind: input, shape index: {}]
  %s2 = inlined_call_operand.vmem [shape: f32[1,128], index: 2, kind: input, shape index: {}]
  %s3 = inlined_call_operand.vmem [shape: f32[8,128], index: 3, kind: input, shape index: {}]
  %s4 = inlined_call_operand.vmem [shape: f32[1,128], index: 4, kind: input, shape index: {}]
  %s5 = inlined_call_operand.vmem [shape: f32[2,1,128], index: 5, kind: input, shape index: {}]
  %s6 = inlined_call_operand.vmem [shape: f32[2,1,128], index: 6, kind: input, shape index: {}]
  %s7 = inlined_call_operand.vmem [shape: f32[2,128,384], index: 7, kind: input, shape index: {}]
  %s8 = inlined_call_operand.vmem [shape: f32[2,128,128], index: 8, kind: input, shape index: {}]
  %s9 = inlined_call_operand.vmem [shape: f32[2,1,128], index: 9, kind: input, shape index: {}]
  %s10 = inlined_call_operand.vmem [shape: f32[2,1,128], index: 10, kind: input, shape index: {}]
  %s11 = inlined_call_operand.vmem [shape: f32[2,1,128], index: 11, kind: input, shape index: {}]
  %s12 = inlined_call_operand.vmem [shape: f32[2,128,256], index: 12, kind: input, shape index: {}]
  %s13 = inlined_call_operand.vmem [shape: f32[2,1,256], index: 13, kind: input, shape index: {}]
  %s14 = inlined_call_operand.vmem [shape: f32[2,256,128], index: 14, kind: input, shape index: {}]
  %s15 = inlined_call_operand.vmem [shape: f32[2,1,128], index: 15, kind: input, shape index: {}]
  %s16 = inlined_call_operand.vmem [shape: f32[1,128], index: 16, kind: input, shape index: {}]
  %s17 = inlined_call_operand.vmem [shape: f32[1,128], index: 17, kind: input, shape index: {}]
  %s18 = inlined_call_operand.hbm [shape: f32[2,8,128], index: 18, kind: output, shape index: {}]
  %s19 = sld [smem:[#allocation0]]
  $region113: #{_lambda_.1} parent=0
    _
  %s21 = ssub.s32 1, %s19
  %s22 = scalar_select 0, %s21, %s19
  $region1: #{_lambda_.1} parent=0
    #allocation3 [shape = 'u8[8192]{0}', space=vmem, size = 0x2000, scoped, tag = 'output window, operand 0']
    #allocation4 [shape = 's32[2]{0}', space=sflag, size = 0x8, scoped, tag = 'scoped memory for _lambda_.1']
    %23 = vsyncpa [#allocation4], 0
    %s24 = scalar_lea.sflag [#allocation4], 1
    %25 = vsyncpa %s24, 0
    loop: start=0, step=1, limit=6
    $region2: #{_lambda_.1} parent=1 // loop_pre_header
      _
    $region3: #{_lambda_.1} parent=1 // loop_header
      %s27 = sphi 0, %s31
      %p28 = scmp.ge.s32.totalorder %s27, 6
      %s34 = sphi 0, %s46
      %s35 = sphi 0, %s42
      %s36 = sphi 0, %s34
      %s37 = sphi 0, %s35
      %s38 = sphi 0, %s36
      %s39 = sphi 0, %s37
      %s49 = sphi 0, %s51
      %s52 = sphi 0, %s49
      %s53 = sphi 0, %s52
      %s69 = sphi 0, %s53
      %s73 = sphi 0, %s73
      %s75 = sphi 0, %s73
      %s76 = sphi 0, %s75
      %s90 = sphi 0, %s76
      %s94 = sphi 0, %s94
      %s96 = sphi 0, %s94
      %s97 = sphi 0, %s96
      %s111 = sphi 0, %s97
      %s115 = sphi 0, %s115
      %s117 = sphi 0, %s115
      %s118 = sphi 0, %s117
      %s132 = sphi 0, %s118
      %s136 = sphi 0, %s136
      %s138 = sphi 0, %s136
      %s139 = sphi 0, %s138
      %s153 = sphi 0, %s139
      %s159 = sphi 0, %s161
      %s162 = sphi 0, %s159
      %s163 = sphi 0, %s162
      %s179 = sphi 0, %s163
      %s185 = sphi 0, %s187
      %s188 = sphi 0, %s185
      %s189 = sphi 0, %s188
      %s205 = sphi 0, %s189
      %s211 = sphi 0, %s213
      %s214 = sphi 0, %s211
      %s215 = sphi 0, %s214
      %s231 = sphi 0, %s215
      %s237 = sphi 0, %s239
      %s240 = sphi 0, %s237
      %s241 = sphi 0, %s240
      %s257 = sphi 0, %s241
      %s263 = sphi 0, %s265
      %s266 = sphi 0, %s263
      %s267 = sphi 0, %s266
      %s283 = sphi 0, %s267
      %s289 = sphi 0, %s291
      %s292 = sphi 0, %s289
      %s293 = sphi 0, %s292
      %s309 = sphi 0, %s293
      %s315 = sphi 0, %s317
      %s318 = sphi 0, %s315
      %s319 = sphi 0, %s318
      %s335 = sphi 0, %s319
      %s341 = sphi 0, %s343
      %s344 = sphi 0, %s341
      %s345 = sphi 0, %s344
      %s361 = sphi 0, %s345
      %s367 = sphi 0, %s369
      %s370 = sphi 0, %s367
      %s371 = sphi 0, %s370
      %s387 = sphi 0, %s371
      %s393 = sphi 0, %s395
      %s396 = sphi 0, %s393
      %s397 = sphi 0, %s396
      %s413 = sphi 0, %s397
      %s419 = sphi 0, %s421
      %s422 = sphi 0, %s419
      %s423 = sphi 0, %s422
      %s439 = sphi 0, %s423
      %s443 = sphi 0, %s443
      %s445 = sphi 0, %s443
      %s446 = sphi 0, %s445
      %s460 = sphi 0, %s446
      %s464 = sphi 0, %s464
      %s466 = sphi 0, %s464
      %s467 = sphi 0, %s466
      %s481 = sphi 0, %s467
      %s487 = sphi 0, %s489
      %s490 = sphi 0, %s487
      %s491 = sphi 0, %s490
      %s507 = sphi 0, %s491
    $region4: #{_lambda_.1} parent=1 // loop_header_branch
      %30 = sbr.rel (%p28) target = $region8
    $region5: #{_lambda_.1} parent=1 // loop_body
      %s32 = ssub.s32 %s27, 1
      %s33 = ssub.s32 %s27, 2
      %s40 = sadd.s32 1, %s35
      %p41 = scmp.ge.s32.totalorder %s40, 2
      %s42 = scalar_select %p41, 0, %s40
      %s43 = sadd.s32 1, %s34
      %s44 = scalar_select %p41, %s43, %s34
      %p45 = scmp.ge.s32.totalorder %s44, 2
      %s46 = scalar_select %p45, 0, %s44
      %s47 = ssub.s32 %s34, %s46
      %p48 = scmp.eq.s32.totalorder %s47, 0
      %s50 = sadd.s32 %s49, 1
      %s51 = scalar_select %p48, %s49, %s50
      %p54 = pneg %p48
      %p55 = scmp.eq.s32.totalorder %s27, 3
      %p56 = por %p54, %p55
      %p57 = scmp.ne.s32.totalorder %s49, %s52
      %p58 = scmp.eq.s32.totalorder %s27, 0
      %p59 = por %p57, %p58
      %p60 = scmp.ne.s32.totalorder %s49, %s52
      %p61 = scmp.eq.s32.totalorder %s32, 3
      %p62 = por %p60, %p61
      %p63 = scmp.ne.s32.totalorder %s52, %s53
      %p64 = scmp.eq.s32.totalorder %s32, 0
      %p65 = por %p63, %p64
      %p66 = scmp.ne.s32.totalorder %s52, %s53
      %p67 = scmp.eq.s32.totalorder %s33, 3
      %p68 = por %p66, %p67
      %p70 = scmp.ne.s32.totalorder %s53, %s69
      %p71 = scmp.eq.s32.totalorder %s33, 0
      %p72 = por %p70, %p71
      %s74 = sadd.s32 %s73, 1
      %p77 = scmp.eq.s32.totalorder %s27, 3
      %p78 = scmp.ne.s32.totalorder %s73, %s75
      %p79 = scmp.eq.s32.totalorder %s27, 0
      %p80 = por %p78, %p79
      %p81 = scmp.ne.s32.totalorder %s73, %s75
      %p82 = scmp.eq.s32.totalorder %s32, 3
      %p83 = por %p81, %p82
      %p84 = scmp.ne.s32.totalorder %s75, %s76
      %p85 = scmp.eq.s32.totalorder %s32, 0
      %p86 = por %p84, %p85
      %p87 = scmp.ne.s32.totalorder %s75, %s76
      %p88 = scmp.eq.s32.totalorder %s33, 3
      %p89 = por %p87, %p88
      %p91 = scmp.ne.s32.totalorder %s76, %s90
      %p92 = scmp.eq.s32.totalorder %s33, 0
      %p93 = por %p91, %p92
      %s95 = sadd.s32 %s94, 1
      %p98 = scmp.eq.s32.totalorder %s27, 3
      %p99 = scmp.ne.s32.totalorder %s94, %s96
      %p100 = scmp.eq.s32.totalorder %s27, 0
      %p101 = por %p99, %p100
      %p102 = scmp.ne.s32.totalorder %s94, %s96
      %p103 = scmp.eq.s32.totalorder %s32, 3
      %p104 = por %p102, %p103
      %p105 = scmp.ne.s32.totalorder %s96, %s97
      %p106 = scmp.eq.s32.totalorder %s32, 0
      %p107 = por %p105, %p106
      %p108 = scmp.ne.s32.totalorder %s96, %s97
      %p109 = scmp.eq.s32.totalorder %s33, 3
      %p110 = por %p108, %p109
      %p112 = scmp.ne.s32.totalorder %s97, %s111
      %p113 = scmp.eq.s32.totalorder %s33, 0
      %p114 = por %p112, %p113
      %s116 = sadd.s32 %s115, 1
      %p119 = scmp.eq.s32.totalorder %s27, 3
      %p120 = scmp.ne.s32.totalorder %s115, %s117
      %p121 = scmp.eq.s32.totalorder %s27, 0
      %p122 = por %p120, %p121
      %p123 = scmp.ne.s32.totalorder %s115, %s117
      %p124 = scmp.eq.s32.totalorder %s32, 3
      %p125 = por %p123, %p124
      %p126 = scmp.ne.s32.totalorder %s117, %s118
      %p127 = scmp.eq.s32.totalorder %s32, 0
      %p128 = por %p126, %p127
      %p129 = scmp.ne.s32.totalorder %s117, %s118
      %p130 = scmp.eq.s32.totalorder %s33, 3
      %p131 = por %p129, %p130
      %p133 = scmp.ne.s32.totalorder %s118, %s132
      %p134 = scmp.eq.s32.totalorder %s33, 0
      %p135 = por %p133, %p134
      %s137 = sadd.s32 %s136, 1
      %p140 = scmp.eq.s32.totalorder %s27, 3
      %p141 = scmp.ne.s32.totalorder %s136, %s138
      %p142 = scmp.eq.s32.totalorder %s27, 0
      %p143 = por %p141, %p142
      %p144 = scmp.ne.s32.totalorder %s136, %s138
      %p145 = scmp.eq.s32.totalorder %s32, 3
      %p146 = por %p144, %p145
      %p147 = scmp.ne.s32.totalorder %s138, %s139
      %p148 = scmp.eq.s32.totalorder %s32, 0
      %p149 = por %p147, %p148
      %p150 = scmp.ne.s32.totalorder %s138, %s139
      %p151 = scmp.eq.s32.totalorder %s33, 3
      %p152 = por %p150, %p151
      %p154 = scmp.ne.s32.totalorder %s139, %s153
      %p155 = scmp.eq.s32.totalorder %s33, 0
      %p156 = por %p154, %p155
      %s157 = ssub.s32 %s35, %s42
      %p158 = scmp.eq.s32.totalorder %s157, 0
      %s160 = sadd.s32 %s159, 1
      %s161 = scalar_select %p158, %s159, %s160
      %p164 = pneg %p158
      %p165 = scmp.eq.s32.totalorder %s27, 3
      %p166 = por %p164, %p165
      %p167 = scmp.ne.s32.totalorder %s159, %s162
      %p168 = scmp.eq.s32.totalorder %s27, 0
      %p169 = por %p167, %p168
      %p170 = scmp.ne.s32.totalorder %s159, %s162
      %p171 = scmp.eq.s32.totalorder %s32, 3
      %p172 = por %p170, %p171
      %p173 = scmp.ne.s32.totalorder %s162, %s163
      %p174 = scmp.eq.s32.totalorder %s32, 0
      %p175 = por %p173, %p174
      %p176 = scmp.ne.s32.totalorder %s162, %s163
      %p177 = scmp.eq.s32.totalorder %s33, 3
      %p178 = por %p176, %p177
      %p180 = scmp.ne.s32.totalorder %s163, %s179
      %p181 = scmp.eq.s32.totalorder %s33, 0
      %p182 = por %p180, %p181
      %s183 = ssub.s32 %s35, %s42
      %p184 = scmp.eq.s32.totalorder %s183, 0
      %s186 = sadd.s32 %s185, 1
      %s187 = scalar_select %p184, %s185, %s186
      %p190 = pneg %p184
      %p191 = scmp.eq.s32.totalorder %s27, 3
      %p192 = por %p190, %p191
      %p193 = scmp.ne.s32.totalorder %s185, %s188
      %p194 = scmp.eq.s32.totalorder %s27, 0
      %p195 = por %p193, %p194
      %p196 = scmp.ne.s32.totalorder %s185, %s188
      %p197 = scmp.eq.s32.totalorder %s32, 3
      %p198 = por %p196, %p197
      %p199 = scmp.ne.s32.totalorder %s188, %s189
      %p200 = scmp.eq.s32.totalorder %s32, 0
      %p201 = por %p199, %p200
      %p202 = scmp.ne.s32.totalorder %s188, %s189
      %p203 = scmp.eq.s32.totalorder %s33, 3
      %p204 = por %p202, %p203
      %p206 = scmp.ne.s32.totalorder %s189, %s205
      %p207 = scmp.eq.s32.totalorder %s33, 0
      %p208 = por %p206, %p207
      %s209 = ssub.s32 %s35, %s42
      %p210 = scmp.eq.s32.totalorder %s209, 0
      %s212 = sadd.s32 %s211, 1
      %s213 = scalar_select %p210, %s211, %s212
      %p216 = pneg %p210
      %p217 = scmp.eq.s32.totalorder %s27, 3
      %p218 = por %p216, %p217
      %p219 = scmp.ne.s32.totalorder %s211, %s214
      %p220 = scmp.eq.s32.totalorder %s27, 0
      %p221 = por %p219, %p220
      %p222 = scmp.ne.s32.totalorder %s211, %s214
      %p223 = scmp.eq.s32.totalorder %s32, 3
      %p224 = por %p222, %p223
      %p225 = scmp.ne.s32.totalorder %s214, %s215
      %p226 = scmp.eq.s32.totalorder %s32, 0
      %p227 = por %p225, %p226
      %p228 = scmp.ne.s32.totalorder %s214, %s215
      %p229 = scmp.eq.s32.totalorder %s33, 3
      %p230 = por %p228, %p229
      %p232 = scmp.ne.s32.totalorder %s215, %s231
      %p233 = scmp.eq.s32.totalorder %s33, 0
      %p234 = por %p232, %p233
      %s235 = ssub.s32 %s35, %s42
      %p236 = scmp.eq.s32.totalorder %s235, 0
      %s238 = sadd.s32 %s237, 1
      %s239 = scalar_select %p236, %s237, %s238
      %p242 = pneg %p236
      %p243 = scmp.eq.s32.totalorder %s27, 3
      %p244 = por %p242, %p243
      %p245 = scmp.ne.s32.totalorder %s237, %s240
      %p246 = scmp.eq.s32.totalorder %s27, 0
      %p247 = por %p245, %p246
      %p248 = scmp.ne.s32.totalorder %s237, %s240
      %p249 = scmp.eq.s32.totalorder %s32, 3
      %p250 = por %p248, %p249
      %p251 = scmp.ne.s32.totalorder %s240, %s241
      %p252 = scmp.eq.s32.totalorder %s32, 0
      %p253 = por %p251, %p252
      %p254 = scmp.ne.s32.totalorder %s240, %s241
      %p255 = scmp.eq.s32.totalorder %s33, 3
      %p256 = por %p254, %p255
      %p258 = scmp.ne.s32.totalorder %s241, %s257
      %p259 = scmp.eq.s32.totalorder %s33, 0
      %p260 = por %p258, %p259
      %s261 = ssub.s32 %s35, %s42
      %p262 = scmp.eq.s32.totalorder %s261, 0
      %s264 = sadd.s32 %s263, 1
      %s265 = scalar_select %p262, %s263, %s264
      %p268 = pneg %p262
      %p269 = scmp.eq.s32.totalorder %s27, 3
      %p270 = por %p268, %p269
      %p271 = scmp.ne.s32.totalorder %s263, %s266
      %p272 = scmp.eq.s32.totalorder %s27, 0
      %p273 = por %p271, %p272
      %p274 = scmp.ne.s32.totalorder %s263, %s266
      %p275 = scmp.eq.s32.totalorder %s32, 3
      %p276 = por %p274, %p275
      %p277 = scmp.ne.s32.totalorder %s266, %s267
      %p278 = scmp.eq.s32.totalorder %s32, 0
      %p279 = por %p277, %p278
      %p280 = scmp.ne.s32.totalorder %s266, %s267
      %p281 = scmp.eq.s32.totalorder %s33, 3
      %p282 = por %p280, %p281
      %p284 = scmp.ne.s32.totalorder %s267, %s283
      %p285 = scmp.eq.s32.totalorder %s33, 0
      %p286 = por %p284, %p285
      %s287 = ssub.s32 %s35, %s42
      %p288 = scmp.eq.s32.totalorder %s287, 0
      %s290 = sadd.s32 %s289, 1
      %s291 = scalar_select %p288, %s289, %s290
      %p294 = pneg %p288
      %p295 = scmp.eq.s32.totalorder %s27, 3
      %p296 = por %p294, %p295
      %p297 = scmp.ne.s32.totalorder %s289, %s292
      %p298 = scmp.eq.s32.totalorder %s27, 0
      %p299 = por %p297, %p298
      %p300 = scmp.ne.s32.totalorder %s289, %s292
      %p301 = scmp.eq.s32.totalorder %s32, 3
      %p302 = por %p300, %p301
      %p303 = scmp.ne.s32.totalorder %s292, %s293
      %p304 = scmp.eq.s32.totalorder %s32, 0
      %p305 = por %p303, %p304
      %p306 = scmp.ne.s32.totalorder %s292, %s293
      %p307 = scmp.eq.s32.totalorder %s33, 3
      %p308 = por %p306, %p307
      %p310 = scmp.ne.s32.totalorder %s293, %s309
      %p311 = scmp.eq.s32.totalorder %s33, 0
      %p312 = por %p310, %p311
      %s313 = ssub.s32 %s35, %s42
      %p314 = scmp.eq.s32.totalorder %s313, 0
      %s316 = sadd.s32 %s315, 1
      %s317 = scalar_select %p314, %s315, %s316
      %p320 = pneg %p314
      %p321 = scmp.eq.s32.totalorder %s27, 3
      %p322 = por %p320, %p321
      %p323 = scmp.ne.s32.totalorder %s315, %s318
      %p324 = scmp.eq.s32.totalorder %s27, 0
      %p325 = por %p323, %p324
      %p326 = scmp.ne.s32.totalorder %s315, %s318
      %p327 = scmp.eq.s32.totalorder %s32, 3
      %p328 = por %p326, %p327
      %p329 = scmp.ne.s32.totalorder %s318, %s319
      %p330 = scmp.eq.s32.totalorder %s32, 0
      %p331 = por %p329, %p330
      %p332 = scmp.ne.s32.totalorder %s318, %s319
      %p333 = scmp.eq.s32.totalorder %s33, 3
      %p334 = por %p332, %p333
      %p336 = scmp.ne.s32.totalorder %s319, %s335
      %p337 = scmp.eq.s32.totalorder %s33, 0
      %p338 = por %p336, %p337
      %s339 = ssub.s32 %s35, %s42
      %p340 = scmp.eq.s32.totalorder %s339, 0
      %s342 = sadd.s32 %s341, 1
      %s343 = scalar_select %p340, %s341, %s342
      %p346 = pneg %p340
      %p347 = scmp.eq.s32.totalorder %s27, 3
      %p348 = por %p346, %p347
      %p349 = scmp.ne.s32.totalorder %s341, %s344
      %p350 = scmp.eq.s32.totalorder %s27, 0
      %p351 = por %p349, %p350
      %p352 = scmp.ne.s32.totalorder %s341, %s344
      %p353 = scmp.eq.s32.totalorder %s32, 3
      %p354 = por %p352, %p353
      %p355 = scmp.ne.s32.totalorder %s344, %s345
      %p356 = scmp.eq.s32.totalorder %s32, 0
      %p357 = por %p355, %p356
      %p358 = scmp.ne.s32.totalorder %s344, %s345
      %p359 = scmp.eq.s32.totalorder %s33, 3
      %p360 = por %p358, %p359
      %p362 = scmp.ne.s32.totalorder %s345, %s361
      %p363 = scmp.eq.s32.totalorder %s33, 0
      %p364 = por %p362, %p363
      %s365 = ssub.s32 %s35, %s42
      %p366 = scmp.eq.s32.totalorder %s365, 0
      %s368 = sadd.s32 %s367, 1
      %s369 = scalar_select %p366, %s367, %s368
      %p372 = pneg %p366
      %p373 = scmp.eq.s32.totalorder %s27, 3
      %p374 = por %p372, %p373
      %p375 = scmp.ne.s32.totalorder %s367, %s370
      %p376 = scmp.eq.s32.totalorder %s27, 0
      %p377 = por %p375, %p376
      %p378 = scmp.ne.s32.totalorder %s367, %s370
      %p379 = scmp.eq.s32.totalorder %s32, 3
      %p380 = por %p378, %p379
      %p381 = scmp.ne.s32.totalorder %s370, %s371
      %p382 = scmp.eq.s32.totalorder %s32, 0
      %p383 = por %p381, %p382
      %p384 = scmp.ne.s32.totalorder %s370, %s371
      %p385 = scmp.eq.s32.totalorder %s33, 3
      %p386 = por %p384, %p385
      %p388 = scmp.ne.s32.totalorder %s371, %s387
      %p389 = scmp.eq.s32.totalorder %s33, 0
      %p390 = por %p388, %p389
      %s391 = ssub.s32 %s35, %s42
      %p392 = scmp.eq.s32.totalorder %s391, 0
      %s394 = sadd.s32 %s393, 1
      %s395 = scalar_select %p392, %s393, %s394
      %p398 = pneg %p392
      %p399 = scmp.eq.s32.totalorder %s27, 3
      %p400 = por %p398, %p399
      %p401 = scmp.ne.s32.totalorder %s393, %s396
      %p402 = scmp.eq.s32.totalorder %s27, 0
      %p403 = por %p401, %p402
      %p404 = scmp.ne.s32.totalorder %s393, %s396
      %p405 = scmp.eq.s32.totalorder %s32, 3
      %p406 = por %p404, %p405
      %p407 = scmp.ne.s32.totalorder %s396, %s397
      %p408 = scmp.eq.s32.totalorder %s32, 0
      %p409 = por %p407, %p408
      %p410 = scmp.ne.s32.totalorder %s396, %s397
      %p411 = scmp.eq.s32.totalorder %s33, 3
      %p412 = por %p410, %p411
      %p414 = scmp.ne.s32.totalorder %s397, %s413
      %p415 = scmp.eq.s32.totalorder %s33, 0
      %p416 = por %p414, %p415
      %s417 = ssub.s32 %s35, %s42
      %p418 = scmp.eq.s32.totalorder %s417, 0
      %s420 = sadd.s32 %s419, 1
      %s421 = scalar_select %p418, %s419, %s420
      %p424 = pneg %p418
      %p425 = scmp.eq.s32.totalorder %s27, 3
      %p426 = por %p424, %p425
      %p427 = scmp.ne.s32.totalorder %s419, %s422
      %p428 = scmp.eq.s32.totalorder %s27, 0
      %p429 = por %p427, %p428
      %p430 = scmp.ne.s32.totalorder %s419, %s422
      %p431 = scmp.eq.s32.totalorder %s32, 3
      %p432 = por %p430, %p431
      %p433 = scmp.ne.s32.totalorder %s422, %s423
      %p434 = scmp.eq.s32.totalorder %s32, 0
      %p435 = por %p433, %p434
      %p436 = scmp.ne.s32.totalorder %s422, %s423
      %p437 = scmp.eq.s32.totalorder %s33, 3
      %p438 = por %p436, %p437
      %p440 = scmp.ne.s32.totalorder %s423, %s439
      %p441 = scmp.eq.s32.totalorder %s33, 0
      %p442 = por %p440, %p441
      %s444 = sadd.s32 %s443, 1
      %p447 = scmp.eq.s32.totalorder %s27, 3
      %p448 = scmp.ne.s32.totalorder %s443, %s445
      %p449 = scmp.eq.s32.totalorder %s27, 0
      %p450 = por %p448, %p449
      %p451 = scmp.ne.s32.totalorder %s443, %s445
      %p452 = scmp.eq.s32.totalorder %s32, 3
      %p453 = por %p451, %p452
      %p454 = scmp.ne.s32.totalorder %s445, %s446
      %p455 = scmp.eq.s32.totalorder %s32, 0
      %p456 = por %p454, %p455
      %p457 = scmp.ne.s32.totalorder %s445, %s446
      %p458 = scmp.eq.s32.totalorder %s33, 3
      %p459 = por %p457, %p458
      %p461 = scmp.ne.s32.totalorder %s446, %s460
      %p462 = scmp.eq.s32.totalorder %s33, 0
      %p463 = por %p461, %p462
      %s465 = sadd.s32 %s464, 1
      %p468 = scmp.eq.s32.totalorder %s27, 3
      %p469 = scmp.ne.s32.totalorder %s464, %s466
      %p470 = scmp.eq.s32.totalorder %s27, 0
      %p471 = por %p469, %p470
      %p472 = scmp.ne.s32.totalorder %s464, %s466
      %p473 = scmp.eq.s32.totalorder %s32, 3
      %p474 = por %p472, %p473
      %p475 = scmp.ne.s32.totalorder %s466, %s467
      %p476 = scmp.eq.s32.totalorder %s32, 0
      %p477 = por %p475, %p476
      %p478 = scmp.ne.s32.totalorder %s466, %s467
      %p479 = scmp.eq.s32.totalorder %s33, 3
      %p480 = por %p478, %p479
      %p482 = scmp.ne.s32.totalorder %s467, %s481
      %p483 = scmp.eq.s32.totalorder %s33, 0
      %p484 = por %p482, %p483
      %s485 = ssub.s32 %s34, %s46
      %p486 = scmp.eq.s32.totalorder %s485, 0
      %s488 = sadd.s32 %s487, 1
      %s489 = scalar_select %p486, %s487, %s488
      %p492 = pneg %p486
      %p493 = scmp.eq.s32.totalorder %s27, 3
      %p494 = por %p492, %p493
      %p495 = scmp.ne.s32.totalorder %s487, %s490
      %p496 = scmp.eq.s32.totalorder %s27, 0
      %p497 = por %p495, %p496
      %p498 = scmp.ne.s32.totalorder %s487, %s490
      %p499 = scmp.eq.s32.totalorder %s32, 3
      %p500 = por %p498, %p499
      %p501 = scmp.ne.s32.totalorder %s490, %s491
      %p502 = scmp.eq.s32.totalorder %s32, 0
      %p503 = por %p501, %p502
      %p504 = scmp.ne.s32.totalorder %s490, %s491
      %p505 = scmp.eq.s32.totalorder %s33, 3
      %p506 = por %p504, %p505
      %p508 = scmp.ne.s32.totalorder %s491, %s507
      %p509 = scmp.eq.s32.totalorder %s33, 0
      %p510 = por %p508, %p509
      %p511 = scmp.le.s32.totalorder 1, %s27
      %p512 = scmp.lt.s32.totalorder %s27, 5
      %p513 = pnand %p511, %p512
      %p514 = pneg %p513
      // Predicated region
      $region9: #{_lambda_.1} parent=5 // pred_check
        _
      $region10: #{_lambda_.1} parent=5 // pred_check_branch
        %516 = sbr.rel (%p513) target = $region12
      $region11: #{_lambda_.1} parent=5 // pred_region
        %s517 = ssub.s32 %s27, 1
        // Predicated region
        $region13: #{_lambda_.1} parent=11 // pred_check
          %p518 = pneg %p86
        $region14: #{_lambda_.1} parent=11 // pred_check_branch
          %520 = sbr.rel (%p518) target = $region16
        $region15: #{_lambda_.1} parent=11 // pred_region
          _
        $region16: #{_lambda_.1} parent=11 // pred_fallthru
          _
        // Predicated region
        $region17: #{_lambda_.1} parent=11 // pred_check
          %p521 = pneg %p107
        $region18: #{_lambda_.1} parent=11 // pred_check_branch
          %523 = sbr.rel (%p521) target = $region20
        $region19: #{_lambda_.1} parent=11 // pred_region
          _
        $region20: #{_lambda_.1} parent=11 // pred_fallthru
          _
        // Predicated region
        $region21: #{_lambda_.1} parent=11 // pred_check
          %p524 = pneg %p128
        $region22: #{_lambda_.1} parent=11 // pred_check_branch
          %526 = sbr.rel (%p524) target = $region24
        $region23: #{_lambda_.1} parent=11 // pred_region
          _
        $region24: #{_lambda_.1} parent=11 // pred_fallthru
          _
        // Predicated region
        $region25: #{_lambda_.1} parent=11 // pred_check
          %p527 = pneg %p149
        $region26: #{_lambda_.1} parent=11 // pred_check_branch
          %529 = sbr.rel (%p527) target = $region28
        $region27: #{_lambda_.1} parent=11 // pred_region
          _
        $region28: #{_lambda_.1} parent=11 // pred_fallthru
          _
        // Predicated region
        $region29: #{_lambda_.1} parent=11 // pred_check
          %p530 = pneg %p456
        $region30: #{_lambda_.1} parent=11 // pred_check_branch
          %532 = sbr.rel (%p530) target = $region32
        $region31: #{_lambda_.1} parent=11 // pred_region
          _
        $region32: #{_lambda_.1} parent=11 // pred_fallthru
          _
        // Predicated region
        $region33: #{_lambda_.1} parent=11 // pred_check
          %p533 = pneg %p477
        $region34: #{_lambda_.1} parent=11 // pred_check_branch
          %535 = sbr.rel (%p533) target = $region36
        $region35: #{_lambda_.1} parent=11 // pred_region
          _
        $region36: #{_lambda_.1} parent=11 // pred_fallthru
          _
      $region12: #{_lambda_.1} parent=5 // pred_fallthru
        _
      %p536 = scmp.lt.s32.totalorder %s27, 4
      // Predicated region
      $region37: #{_lambda_.1} parent=5 // pred_check
        %p537 = pneg %p536
      $region38: #{_lambda_.1} parent=5 // pred_check_branch
        %539 = sbr.rel (%p537) target = $region40
      $region39: #{_lambda_.1} parent=5 // pred_region
        // Predicated region
        $region41: #{_lambda_.1} parent=39 // pred_check
          %p540 = pneg %p59
        $region42: #{_lambda_.1} parent=39 // pred_check_branch
          %542 = sbr.rel (%p540) target = $region44
        $region43: #{_lambda_.1} parent=39 // pred_region
          %p543 = scmp.lt.s32.totalorder %s34, 1
          %s544 = scalar_select %p543, %s34, 1
          %s545 = smul.addr %s544, 4
          %s546 = smul.addr %s545, 8
          %s547 = scalar_lea.vmem %s0, %s546
        $region44: #{_lambda_.1} parent=39 // pred_fallthru
          _
        // Predicated region
        $region45: #{_lambda_.1} parent=39 // pred_check
          %p548 = pneg %p169
        $region46: #{_lambda_.1} parent=39 // pred_check_branch
          %550 = sbr.rel (%p548) target = $region48
        $region47: #{_lambda_.1} parent=39 // pred_region
          %p551 = scmp.lt.s32.totalorder %s35, 1
          %s552 = scalar_select %p551, %s35, 1
          %s553 = scalar_lea.vmem %s5, %s552
        $region48: #{_lambda_.1} parent=39 // pred_fallthru
          _
        // Predicated region
        $region49: #{_lambda_.1} parent=39 // pred_check
          %p554 = pneg %p195
        $region50: #{_lambda_.1} parent=39 // pred_check_branch
          %556 = sbr.rel (%p554) target = $region52
        $region51: #{_lambda_.1} parent=39 // pred_region
          %p557 = scmp.lt.s32.totalorder %s35, 1
          %s558 = scalar_select %p557, %s35, 1
          %s559 = scalar_lea.vmem %s6, %s558
        $region52: #{_lambda_.1} parent=39 // pred_fallthru
          _
        // Predicated region
        $region53: #{_lambda_.1} parent=39 // pred_check
          %p560 = pneg %p221
        $region54: #{_lambda_.1} parent=39 // pred_check_branch
          %562 = sbr.rel (%p560) target = $region56
        $region55: #{_lambda_.1} parent=39 // pred_region
          %p563 = scmp.lt.s32.totalorder %s35, 1
          %s564 = scalar_select %p563, %s35, 1
          %s565 = smul.addr %s564, 48
          %s566 = smul.addr %s565, 8
          %s567 = scalar_lea.vmem %s7, %s566
        $region56: #{_lambda_.1} parent=39 // pred_fallthru
          _
        // Predicated region
        $region57: #{_lambda_.1} parent=39 // pred_check
          %p568 = pneg %p247
        $region58: #{_lambda_.1} parent=39 // pred_check_branch
          %570 = sbr.rel (%p568) target = $region60
        $region59: #{_lambda_.1} parent=39 // pred_region
          %p571 = scmp.lt.s32.totalorder %s35, 1
          %s572 = scalar_select %p571, %s35, 1
          %s573 = smul.addr %s572, 16
          %s574 = smul.addr %s573, 8
          %s575 = scalar_lea.vmem %s8, %s574
        $region60: #{_lambda_.1} parent=39 // pred_fallthru
          _
        // Predicated region
        $region61: #{_lambda_.1} parent=39 // pred_check
          %p576 = pneg %p273
        $region62: #{_lambda_.1} parent=39 // pred_check_branch
          %578 = sbr.rel (%p576) target = $region64
        $region63: #{_lambda_.1} parent=39 // pred_region
          %p579 = scmp.lt.s32.totalorder %s35, 1
          %s580 = scalar_select %p579, %s35, 1
          %s581 = scalar_lea.vmem %s9, %s580
        $region64: #{_lambda_.1} parent=39 // pred_fallthru
          _
        // Predicated region
        $region65: #{_lambda_.1} parent=39 // pred_check
          %p582 = pneg %p299
        $region66: #{_lambda_.1} parent=39 // pred_check_branch
          %584 = sbr.rel (%p582) target = $region68
        $region67: #{_lambda_.1} parent=39 // pred_region
          %p585 = scmp.lt.s32.totalorder %s35, 1
          %s586 = scalar_select %p585, %s35, 1
          %s587 = scalar_lea.vmem %s10, %s586
        $region68: #{_lambda_.1} parent=39 // pred_fallthru
          _
        // Predicated region
        $region69: #{_lambda_.1} parent=39 // pred_check
          %p588 = pneg %p325
        $region70: #{_lambda_.1} parent=39 // pred_check_branch
          %590 = sbr.rel (%p588) target = $region72
        $region71: #{_lambda_.1} parent=39 // pred_region
          %p591 = scmp.lt.s32.totalorder %s35, 1
          %s592 = scalar_select %p591, %s35, 1
          %s593 = scalar_lea.vmem %s11, %s592
        $region72: #{_lambda_.1} parent=39 // pred_fallthru
          _
        // Predicated region
        $region73: #{_lambda_.1} parent=39 // pred_check
          %p594 = pneg %p351
        $region74: #{_lambda_.1} parent=39 // pred_check_branch
          %596 = sbr.rel (%p594) target = $region76
        $region75: #{_lambda_.1} parent=39 // pred_region
          %p597 = scmp.lt.s32.totalorder %s35, 1
          %s598 = scalar_select %p597, %s35, 1
          %s599 = smul.addr %s598, 32
          %s600 = smul.addr %s599, 8
          %s601 = scalar_lea.vmem %s12, %s600
        $region76: #{_lambda_.1} parent=39 // pred_fallthru
          _
        // Predicated region
        $region77: #{_lambda_.1} parent=39 // pred_check
          %p602 = pneg %p377
        $region78: #{_lambda_.1} parent=39 // pred_check_branch
          %604 = sbr.rel (%p602) target = $region80
        $region79: #{_lambda_.1} parent=39 // pred_region
          %p605 = scmp.lt.s32.totalorder %s35, 1
          %s606 = scalar_select %p605, %s35, 1
          %s607 = smul.addr %s606, 2
          %s608 = scalar_lea.vmem %s13, %s607
        $region80: #{_lambda_.1} parent=39 // pred_fallthru
          _
        // Predicated region
        $region81: #{_lambda_.1} parent=39 // pred_check
          %p609 = pneg %p403
        $region82: #{_lambda_.1} parent=39 // pred_check_branch
          %611 = sbr.rel (%p609) target = $region84
        $region83: #{_lambda_.1} parent=39 // pred_region
          %p612 = scmp.lt.s32.totalorder %s35, 1
          %s613 = scalar_select %p612, %s35, 1
          %s614 = smul.addr %s613, 32
          %s615 = smul.addr %s614, 8
          %s616 = scalar_lea.vmem %s14, %s615
        $region84: #{_lambda_.1} parent=39 // pred_fallthru
          _
        // Predicated region
        $region85: #{_lambda_.1} parent=39 // pred_check
          %p617 = pneg %p429
        $region86: #{_lambda_.1} parent=39 // pred_check_branch
          %619 = sbr.rel (%p617) target = $region88
        $region87: #{_lambda_.1} parent=39 // pred_region
          %p620 = scmp.lt.s32.totalorder %s35, 1
          %s621 = scalar_select %p620, %s35, 1
          %s622 = scalar_lea.vmem %s15, %s621
        $region88: #{_lambda_.1} parent=39 // pred_fallthru
          _
      $region40: #{_lambda_.1} parent=5 // pred_fallthru
        _
      %p623 = scmp.le.s32.totalorder 1, %s27
      %p624 = scmp.lt.s32.totalorder %s27, 5
      %p625 = pnand %p623, %p624
      %p626 = pneg %p625
      // Predicated region
      $region89: #{_lambda_.1} parent=5 // pred_check
        _
      $region90: #{_lambda_.1} parent=5 // pred_check_branch
        %628 = sbr.rel (%p625) target = $region92
      $region91: #{_lambda_.1} parent=5 // pred_region
        %s629 = ssub.s32 %s27, 1
        %p630 = scmp.lt.s32.totalorder %s36, 1
        %s631 = scalar_select %p630, %s36, 1
        %s632 = smul.addr %s631, 4
        %s633 = smul.addr %s632, 8
        %s634 = scalar_lea.vmem %s0, %s633
        %p635 = pneg %p65
        %p636 = pneg %p62
        %p637 = pneg %p86
        %p638 = pneg %p83
        %p639 = pneg %p107
        %p640 = pneg %p104
        %p641 = pneg %p128
        %p642 = pneg %p125
        %p643 = pneg %p149
        %p644 = pneg %p146
        %p645 = scmp.lt.s32.totalorder %s37, 1
        %s646 = scalar_select %p645, %s37, 1
        %s647 = scalar_lea.vmem %s5, %s646
        %p648 = pneg %p175
        %p649 = pneg %p172
        %p650 = scmp.lt.s32.totalorder %s37, 1
        %s651 = scalar_select %p650, %s37, 1
        %s652 = scalar_lea.vmem %s6, %s651
        %p653 = pneg %p201
        %p654 = pneg %p198
        %p655 = scmp.lt.s32.totalorder %s37, 1
        %s656 = scalar_select %p655, %s37, 1
        %s657 = smul.addr %s656, 48
        %s658 = smul.addr %s657, 8
        %s659 = scalar_lea.vmem %s7, %s658
        %p660 = pneg %p227
        %p661 = pneg %p224
        %p662 = scmp.lt.s32.totalorder %s37, 1
        %s663 = scalar_select %p662, %s37, 1
        %s664 = smul.addr %s663, 16
        %s665 = smul.addr %s664, 8
        %s666 = scalar_lea.vmem %s8, %s665
        %p667 = pneg %p253
        %p668 = pneg %p250
        %p669 = scmp.lt.s32.totalorder %s37, 1
        %s670 = scalar_select %p669, %s37, 1
        %s671 = scalar_lea.vmem %s9, %s670
        %p672 = pneg %p279
        %p673 = pneg %p276
        %p674 = scmp.lt.s32.totalorder %s37, 1
        %s675 = scalar_select %p674, %s37, 1
        %s676 = scalar_lea.vmem %s10, %s675
        %p677 = pneg %p305
        %p678 = pneg %p302
        %p679 = scmp.lt.s32.totalorder %s37, 1
        %s680 = scalar_select %p679, %s37, 1
        %s681 = scalar_lea.vmem %s11, %s680
        %p682 = pneg %p331
        %p683 = pneg %p328
        %p684 = scmp.lt.s32.totalorder %s37, 1
        %s685 = scalar_select %p684, %s37, 1
        %s686 = smul.addr %s685, 32
        %s687 = smul.addr %s686, 8
        %s688 = scalar_lea.vmem %s12, %s687
        %p689 = pneg %p357
        %p690 = pneg %p354
        %p691 = scmp.lt.s32.totalorder %s37, 1
        %s692 = scalar_select %p691, %s37, 1
        %s693 = smul.addr %s692, 2
        %s694 = scalar_lea.vmem %s13, %s693
        %p695 = pneg %p383
        %p696 = pneg %p380
        %p697 = scmp.lt.s32.totalorder %s37, 1
        %s698 = scalar_select %p697, %s37, 1
        %s699 = smul.addr %s698, 32
        %s700 = smul.addr %s699, 8
        %s701 = scalar_lea.vmem %s14, %s700
        %p702 = pneg %p409
        %p703 = pneg %p406
        %p704 = scmp.lt.s32.totalorder %s37, 1
        %s705 = scalar_select %p704, %s37, 1
        %s706 = scalar_lea.vmem %s15, %s705
        %p707 = pneg %p435
        %p708 = pneg %p432
        %p709 = pneg %p456
        %p710 = pneg %p453
        %p711 = pneg %p477
        %p712 = pneg %p474
        %p713 = pneg %p503
        %p714 = pneg %p500
        %s715 = sand.u32 %s490, 1
        %s716 = scalar_lea.sflag [#allocation4], %s715
        %s717 = sand.u32 %s490, 1
        %s718 = smul.addr %s717, 8
        %s719 = scalar_lea.vmem [#allocation3], %s718
        %p720 = scmp.lt.s32.totalorder %s36, 1
        %s721 = scalar_select %p720, %s36, 1
        %s722 = smul.addr %s721, 4
        %s723 = smul.addr %s722, 8
        %s724 = scalar_lea.vmem %s0, %s723
        %p725 = scmp.lt.s32.totalorder %s37, 1
        %s726 = scalar_select %p725, %s37, 1
        %s727 = scalar_lea.vmem %s5, %s726
        %p728 = scmp.lt.s32.totalorder %s37, 1
        %s729 = scalar_select %p728, %s37, 1
        %s730 = scalar_lea.vmem %s6, %s729
        %p731 = scmp.lt.s32.totalorder %s37, 1
        %s732 = scalar_select %p731, %s37, 1
        %s733 = smul.addr %s732, 48
        %s734 = smul.addr %s733, 8
        %s735 = scalar_lea.vmem %s7, %s734
        %p736 = scmp.lt.s32.totalorder %s37, 1
        %s737 = scalar_select %p736, %s37, 1
        %s738 = smul.addr %s737, 16
        %s739 = smul.addr %s738, 8
        %s740 = scalar_lea.vmem %s8, %s739
        %p741 = scmp.lt.s32.totalorder %s37, 1
        %s742 = scalar_select %p741, %s37, 1
        %s743 = scalar_lea.vmem %s9, %s742
        %p744 = scmp.lt.s32.totalorder %s37, 1
        %s745 = scalar_select %p744, %s37, 1
        %s746 = scalar_lea.vmem %s10, %s745
        %p747 = scmp.lt.s32.totalorder %s37, 1
        %s748 = scalar_select %p747, %s37, 1
        %s749 = scalar_lea.vmem %s11, %s748
        %p750 = scmp.lt.s32.totalorder %s37, 1
        %s751 = scalar_select %p750, %s37, 1
        %s752 = smul.addr %s751, 32
        %s753 = smul.addr %s752, 8
        %s754 = scalar_lea.vmem %s12, %s753
        %p755 = scmp.lt.s32.totalorder %s37, 1
        %s756 = scalar_select %p755, %s37, 1
        %s757 = smul.addr %s756, 2
        %s758 = scalar_lea.vmem %s13, %s757
        %p759 = scmp.lt.s32.totalorder %s37, 1
        %s760 = scalar_select %p759, %s37, 1
        %s761 = smul.addr %s760, 32
        %s762 = smul.addr %s761, 8
        %s763 = scalar_lea.vmem %s14, %s762
        %p764 = scmp.lt.s32.totalorder %s37, 1
        %s765 = scalar_select %p764, %s37, 1
        %s766 = scalar_lea.vmem %s15, %s765
        %p768 = scmp.eq.s32.totalorder %s37, 0
        // Predicated region
        $region93: #{_lambda_.1} parent=91 // pred_check
          %p769 = pneg %p768
        $region94: #{_lambda_.1} parent=91 // pred_check_branch
          %771 = sbr.rel (%p769) target = $region96
        $region95: #{_lambda_.1} parent=91 // pred_region
          %v772 = vld [vmem:[%s724] sm:$0xff]
          %v773 = vld [vmem:[%s724 + $0x8] sm:$0xff]
          %v774 = vld [vmem:[%s724 + $0x10] sm:$0xff]
          %v775 = vld [vmem:[%s724 + $0x18] sm:$0xff]
          %v776 = vpack.c.bf16 %v772, %v772
          %v777 = vpack.c.bf16 %v773, %v773
          %v778 = vpack.c.bf16 %v774, %v774
          %v779 = vpack.c.bf16 %v775, %v775
          %v780 = vld [vmem:[%s1] sm:$0xff]
          %v781 = vld [vmem:[%s1 + $0x8] sm:$0xff]
          %v782 = vld [vmem:[%s1 + $0x10] sm:$0xff]
          %v783 = vld [vmem:[%s1 + $0x18] sm:$0xff]
          %v784 = vld [vmem:[%s1 + $0x20] sm:$0xff]
          %v785 = vld [vmem:[%s1 + $0x28] sm:$0xff]
          %v786 = vld [vmem:[%s1 + $0x30] sm:$0xff]
          %v787 = vld [vmem:[%s1 + $0x38] sm:$0xff]
          %v788 = vld [vmem:[%s1 + $0x40] sm:$0xff]
          %v789 = vld [vmem:[%s1 + $0x48] sm:$0xff]
          %v790 = vld [vmem:[%s1 + $0x50] sm:$0xff]
          %v791 = vld [vmem:[%s1 + $0x58] sm:$0xff]
          %v792 = vld [vmem:[%s1 + $0x60] sm:$0xff]
          %v793 = vld [vmem:[%s1 + $0x68] sm:$0xff]
          %v794 = vld [vmem:[%s1 + $0x70] sm:$0xff]
          %v795 = vld [vmem:[%s1 + $0x78] sm:$0xff]
          %v796 = vld [vmem:[%s1 + $0x80] sm:$0xff]
          %v797 = vld [vmem:[%s1 + $0x88] sm:$0xff]
          %v798 = vld [vmem:[%s1 + $0x90] sm:$0xff]
          %v799 = vld [vmem:[%s1 + $0x98] sm:$0xff]
          %v800 = vld [vmem:[%s1 + $0xa0] sm:$0xff]
          %v801 = vld [vmem:[%s1 + $0xa8] sm:$0xff]
          %v802 = vld [vmem:[%s1 + $0xb0] sm:$0xff]
          %v803 = vld [vmem:[%s1 + $0xb8] sm:$0xff]
          %v804 = vld [vmem:[%s1 + $0xc0] sm:$0xff]
          %v805 = vld [vmem:[%s1 + $0xc8] sm:$0xff]
          %v806 = vld [vmem:[%s1 + $0xd0] sm:$0xff]
          %v807 = vld [vmem:[%s1 + $0xd8] sm:$0xff]
          %v808 = vld [vmem:[%s1 + $0xe0] sm:$0xff]
          %v809 = vld [vmem:[%s1 + $0xe8] sm:$0xff]
          %v810 = vld [vmem:[%s1 + $0xf0] sm:$0xff]
          %v811 = vld [vmem:[%s1 + $0xf8] sm:$0xff]
          %v812 = vld [vmem:[%s1 + $0x100] sm:$0xff]
          %v813 = vld [vmem:[%s1 + $0x108] sm:$0xff]
          %v814 = vld [vmem:[%s1 + $0x110] sm:$0xff]
          %v815 = vld [vmem:[%s1 + $0x118] sm:$0xff]
          %v816 = vld [vmem:[%s1 + $0x120] sm:$0xff]
          %v817 = vld [vmem:[%s1 + $0x128] sm:$0xff]
          %v818 = vld [vmem:[%s1 + $0x130] sm:$0xff]
          %v819 = vld [vmem:[%s1 + $0x138] sm:$0xff]
          %v820 = vld [vmem:[%s1 + $0x140] sm:$0xff]
          %v821 = vld [vmem:[%s1 + $0x148] sm:$0xff]
          %v822 = vld [vmem:[%s1 + $0x150] sm:$0xff]
          %v823 = vld [vmem:[%s1 + $0x158] sm:$0xff]
          %v824 = vld [vmem:[%s1 + $0x160] sm:$0xff]
          %v825 = vld [vmem:[%s1 + $0x168] sm:$0xff]
          %v826 = vld [vmem:[%s1 + $0x170] sm:$0xff]
          %v827 = vld [vmem:[%s1 + $0x178] sm:$0xff]
          %v828 = vld [vmem:[%s1 + $0x180] sm:$0xff]
          %v829 = vld [vmem:[%s1 + $0x188] sm:$0xff]
          %v830 = vld [vmem:[%s1 + $0x190] sm:$0xff]
          %v831 = vld [vmem:[%s1 + $0x198] sm:$0xff]
          %v832 = vld [vmem:[%s1 + $0x1a0] sm:$0xff]
          %v833 = vld [vmem:[%s1 + $0x1a8] sm:$0xff]
          %v834 = vld [vmem:[%s1 + $0x1b0] sm:$0xff]
          %v835 = vld [vmem:[%s1 + $0x1b8] sm:$0xff]
          %v836 = vld [vmem:[%s1 + $0x1c0] sm:$0xff]
          %v837 = vld [vmem:[%s1 + $0x1c8] sm:$0xff]
          %v838 = vld [vmem:[%s1 + $0x1d0] sm:$0xff]
          %v839 = vld [vmem:[%s1 + $0x1d8] sm:$0xff]
          %v840 = vld [vmem:[%s1 + $0x1e0] sm:$0xff]
          %v841 = vld [vmem:[%s1 + $0x1e8] sm:$0xff]
          %v842 = vld [vmem:[%s1 + $0x1f0] sm:$0xff]
          %v843 = vld [vmem:[%s1 + $0x1f8] sm:$0xff]
          %v844 = vpack.c.bf16 %v781, %v780
          %v845 = vpack.c.bf16 %v783, %v782
          %v846 = vpack.c.bf16 %v785, %v784
          %v847 = vpack.c.bf16 %v787, %v786
          %v848 = vpack.c.bf16 %v789, %v788
          %v849 = vpack.c.bf16 %v791, %v790
          %v850 = vpack.c.bf16 %v793, %v792
          %v851 = vpack.c.bf16 %v795, %v794
          %v852 = vpack.c.bf16 %v797, %v796
          %v853 = vpack.c.bf16 %v799, %v798
          %v854 = vpack.c.bf16 %v801, %v800
          %v855 = vpack.c.bf16 %v803, %v802
          %v856 = vpack.c.bf16 %v805, %v804
          %v857 = vpack.c.bf16 %v807, %v806
          %v858 = vpack.c.bf16 %v809, %v808
          %v859 = vpack.c.bf16 %v811, %v810
          %v860 = vpack.c.bf16 %v813, %v812
          %v861 = vpack.c.bf16 %v815, %v814
          %v862 = vpack.c.bf16 %v817, %v816
          %v863 = vpack.c.bf16 %v819, %v818
          %v864 = vpack.c.bf16 %v821, %v820
          %v865 = vpack.c.bf16 %v823, %v822
          %v866 = vpack.c.bf16 %v825, %v824
          %v867 = vpack.c.bf16 %v827, %v826
          %v868 = vpack.c.bf16 %v829, %v828
          %v869 = vpack.c.bf16 %v831, %v830
          %v870 = vpack.c.bf16 %v833, %v832
          %v871 = vpack.c.bf16 %v835, %v834
          %v872 = vpack.c.bf16 %v837, %v836
          %v873 = vpack.c.bf16 %v839, %v838
          %v874 = vpack.c.bf16 %v841, %v840
          %v875 = vpack.c.bf16 %v843, %v842
          %v876 = vld [vmem:[%s2] sm:$0x1]
          %v878 = vlaneseq
          %v879 = vshrl.u32 %v878, 7
          %v880 = vsub.s32 0, %v879
          %v881 = vrot.slane %v876, %v880
          %883 = vmatprep.subr.bf16.mxu0 0
          %884 = vmatpush1.bf16.msra.mxu0 %v844
          %885 = vmatprep.subr.bf16.mxu0 0
          %886 = vmatpush1.bf16.msra.mxu0 %v845
          %887 = vmatprep.subr.bf16.mxu0 0
          %888 = vmatpush1.bf16.msra.mxu0 %v846
          %889 = vmatprep.subr.bf16.mxu0 0
          %890 = vmatpush1.bf16.msra.mxu0 %v847
          %891 = vmatprep.subr.bf16.mxu0 0
          %892 = vmatpush1.bf16.msra.mxu0 %v848
          %893 = vmatprep.subr.bf16.mxu0 0
          %894 = vmatpush1.bf16.msra.mxu0 %v849
          %895 = vmatprep.subr.bf16.mxu0 0
          %896 = vmatpush1.bf16.msra.mxu0 %v850
          %897 = vmatprep.subr.bf16.mxu0 0
          %898 = vmatpush1.bf16.msra.mxu0 %v851
          %899 = vmatprep.subr.bf16.mxu0 0
          %900 = vmatpush1.bf16.msra.mxu0 %v852
          %901 = vmatprep.subr.bf16.mxu0 0
          %902 = vmatpush1.bf16.msra.mxu0 %v853
          %903 = vmatprep.subr.bf16.mxu0 0
          %904 = vmatpush1.bf16.msra.mxu0 %v854
          %905 = vmatprep.subr.bf16.mxu0 0
          %906 = vmatpush1.bf16.msra.mxu0 %v855
          %907 = vmatprep.subr.bf16.mxu0 0
          %908 = vmatpush1.bf16.msra.mxu0 %v856
          %909 = vmatprep.subr.bf16.mxu0 0
          %910 = vmatpush1.bf16.msra.mxu0 %v857
          %911 = vmatprep.subr.bf16.mxu0 0
          %912 = vmatpush1.bf16.msra.mxu0 %v858
          %913 = vmatprep.subr.bf16.mxu0 0
          %914 = vmatpush1.bf16.msra.mxu0 %v859
          %915 = vmatprep.mubr.bf16.mxu0 %v777
          %916 = vmatmul.mubr.bf16.gmra.mrb[0].mxu0 %v776
          %v917 = vpop.f32.mrb[0].mxu0
          %v918 = vadd.f32 %v881, %v917
          %v919 = vpop.f32.mrb[0].mxu0
          %v920 = vpop.f32.mrb[0].mxu0
          %v921 = vpop.f32.mrb[0].mxu0
          %922 = vdwg.mxu0
          %923 = vmatprep.subr.bf16.mxu0 0
          %924 = vmatpush1.bf16.msra.mxu0 %v860
          %925 = vmatprep.subr.bf16.mxu0 0
          %926 = vmatpush1.bf16.msra.mxu0 %v861
          %927 = vmatprep.subr.bf16.mxu0 0
          %928 = vmatpush1.bf16.msra.mxu0 %v862
          %929 = vmatprep.subr.bf16.mxu0 0
          %930 = vmatpush1.bf16.msra.mxu0 %v863
          %931 = vmatprep.subr.bf16.mxu0 0
          %932 = vmatpush1.bf16.msra.mxu0 %v864
          %933 = vmatprep.subr.bf16.mxu0 0
          %934 = vmatpush1.bf16.msra.mxu0 %v865
          %935 = vmatprep.subr.bf16.mxu0 0
          %936 = vmatpush1.bf16.msra.mxu0 %v866
          %937 = vmatprep.subr.bf16.mxu0 0
          %938 = vmatpush1.bf16.msra.mxu0 %v867
          %939 = vmatprep.subr.bf16.mxu0 0
          %940 = vmatpush1.bf16.msra.mxu0 %v868
          %941 = vmatprep.subr.bf16.mxu0 0
          %942 = vmatpush1.bf16.msra.mxu0 %v869
          %943 = vmatprep.subr.bf16.mxu0 0
          %944 = vmatpush1.bf16.msra.mxu0 %v870
          %945 = vmatprep.subr.bf16.mxu0 0
          %946 = vmatpush1.bf16.msra.mxu0 %v871
          %947 = vmatprep.subr.bf16.mxu0 0
          %948 = vmatpush1.bf16.msra.mxu0 %v872
          %949 = vmatprep.subr.bf16.mxu0 0
          %950 = vmatpush1.bf16.msra.mxu0 %v873
          %951 = vmatprep.subr.bf16.mxu0 0
          %952 = vmatpush1.bf16.msra.mxu0 %v874
          %953 = vmatprep.subr.bf16.mxu0 0
          %954 = vmatpush1.bf16.msra.mxu0 %v875
          %955 = vmatprep.mubr.bf16.mxu0 %v779
          %956 = vmatmul.mubr.bf16.gmra.mrb[0].mxu0 %v778
          %v957 = vpop.f32.mrb[0].mxu0
          %v958 = vadd.f32 %v918, %v957
          %v959 = vpop.f32.mrb[0].mxu0
          %v960 = vpop.f32.mrb[0].mxu0
          %v961 = vpop.f32.mrb[0].mxu0
          %962 = vdwg.mxu0
          %v963 = vld [vmem:[%s3] sm:$0xff]
          %v964 = vadd.f32 %v958, %v963
          %965 = vst [vmem:[#allocation2] sm:$0xff] 0.0
          %966 = vst [vmem:[#allocation2 + $0x8] sm:$0xff] 0.0
          %v967 = vld [vmem:[%s4] sm:$0x1]
          %968 = vst [vmem:[#allocation2] sm:$0x1] %v967
          %969 = vst [vmem:[#allocation2 + $0x1] sm:$0xff] %v964
        $region96: #{_lambda_.1} parent=91 // pred_fallthru
          _
        %v970 = vld [vmem:[#allocation2] sm:$0xff]
        %v971 = vld [vmem:[#allocation2 + $0x8] sm:$0xff]
        %v972 = vld [vmem:[%s727] sm:$0x1]
        %v973 = vld [vmem:[%s730] sm:$0x1]
        %974 = vadd.xlane.f32.xlu0 %v970
        %v975 = vpop.xlane.xlu0 %974
        %976 = vadd.xlane.f32.xlu0 %v971
        %v977 = vpop.xlane.xlu0 %976
        %v978 = vrcp.pop 128.0
        %v979 = vmul.f32 %v975, %v978
        %v980 = vmul.f32 %v977, %v978
        %v981 = vsub.f32 %v970, %v979
        %v982 = vsub.f32 %v971, %v980
        %v983 = vmul.f32 %v981, %v981
        %v984 = vmul.f32 %v982, %v982
        %985 = vadd.xlane.f32.xlu0 %v983
        %v986 = vpop.xlane.xlu0 %985
        %987 = vadd.xlane.f32.xlu0 %v984
        %v988 = vpop.xlane.xlu0 %987
        %v989 = vmul.f32 %v986, %v978
        %v990 = vmul.f32 %v988, %v978
        %v991 = vadd.f32 %v989, 1e-05
        %v992 = vadd.f32 %v990, 1e-05
        %v993 = vrsqrt.pop %v991
        %v994 = vrsqrt.pop %v992
        %v995 = vmul.f32 %v981, %v993
        %v996 = vmul.f32 %v982, %v994
        %v998 = vlaneseq
        %v999 = vshrl.u32 %v998, 7
        %v1000 = vsub.s32 0, %v999
        %v1001 = vrot.slane %v972, %v1000
        %v1003 = vmul.f32 %v995, %v1001
        %v1004 = vmul.f32 %v996, %v1001
        %v1006 = vlaneseq
        %v1007 = vshrl.u32 %v1006, 7
        %v1008 = vsub.s32 0, %v1007
        %v1009 = vrot.slane %v973, %v1008
        %v1011 = vadd.f32 %v1003, %v1009
        %v1012 = vadd.f32 %v1004, %v1009
        %v1013 = vpack.c.bf16 %v1012, %v1011
        %v1014 = vld [vmem:[%s735] sm:$0xff]
        %v1015 = vld [vmem:[%s735 + $0x8] sm:$0xff]
        %v1016 = vld [vmem:[%s735 + $0x10] sm:$0xff]
        %v1017 = vld [vmem:[%s735 + $0x18] sm:$0xff]
        %v1018 = vld [vmem:[%s735 + $0x20] sm:$0xff]
        %v1019 = vld [vmem:[%s735 + $0x28] sm:$0xff]
        %v1020 = vld [vmem:[%s735 + $0x30] sm:$0xff]
        %v1021 = vld [vmem:[%s735 + $0x38] sm:$0xff]
        %v1022 = vld [vmem:[%s735 + $0x40] sm:$0xff]
        %v1023 = vld [vmem:[%s735 + $0x48] sm:$0xff]
        %v1024 = vld [vmem:[%s735 + $0x50] sm:$0xff]
        %v1025 = vld [vmem:[%s735 + $0x58] sm:$0xff]
        %v1026 = vld [vmem:[%s735 + $0x60] sm:$0xff]
        %v1027 = vld [vmem:[%s735 + $0x68] sm:$0xff]
        %v1028 = vld [vmem:[%s735 + $0x70] sm:$0xff]
        %v1029 = vld [vmem:[%s735 + $0x78] sm:$0xff]
        %v1030 = vld [vmem:[%s735 + $0x80] sm:$0xff]
        %v1031 = vld [vmem:[%s735 + $0x88] sm:$0xff]
        %v1032 = vld [vmem:[%s735 + $0x90] sm:$0xff]
        %v1033 = vld [vmem:[%s735 + $0x98] sm:$0xff]
        %v1034 = vld [vmem:[%s735 + $0xa0] sm:$0xff]
        %v1035 = vld [vmem:[%s735 + $0xa8] sm:$0xff]
        %v1036 = vld [vmem:[%s735 + $0xb0] sm:$0xff]
        %v1037 = vld [vmem:[%s735 + $0xb8] sm:$0xff]
        %v1038 = vld [vmem:[%s735 + $0xc0] sm:$0xff]
        %v1039 = vld [vmem:[%s735 + $0xc8] sm:$0xff]
        %v1040 = vld [vmem:[%s735 + $0xd0] sm:$0xff]
        %v1041 = vld [vmem:[%s735 + $0xd8] sm:$0xff]
        %v1042 = vld [vmem:[%s735 + $0xe0] sm:$0xff]
        %v1043 = vld [vmem:[%s735 + $0xe8] sm:$0xff]
        %v1044 = vld [vmem:[%s735 + $0xf0] sm:$0xff]
        %v1045 = vld [vmem:[%s735 + $0xf8] sm:$0xff]
        %v1046 = vld [vmem:[%s735 + $0x100] sm:$0xff]
        %v1047 = vld [vmem:[%s735 + $0x108] sm:$0xff]
        %v1048 = vld [vmem:[%s735 + $0x110] sm:$0xff]
        %v1049 = vld [vmem:[%s735 + $0x118] sm:$0xff]
        %v1050 = vld [vmem:[%s735 + $0x120] sm:$0xff]
        %v1051 = vld [vmem:[%s735 + $0x128] sm:$0xff]
        %v1052 = vld [vmem:[%s735 + $0x130] sm:$0xff]
        %v1053 = vld [vmem:[%s735 + $0x138] sm:$0xff]
        %v1054 = vld [vmem:[%s735 + $0x140] sm:$0xff]
        %v1055 = vld [vmem:[%s735 + $0x148] sm:$0xff]
        %v1056 = vld [vmem:[%s735 + $0x150] sm:$0xff]
        %v1057 = vld [vmem:[%s735 + $0x158] sm:$0xff]
        %v1058 = vld [vmem:[%s735 + $0x160] sm:$0xff]
        %v1059 = vld [vmem:[%s735 + $0x168] sm:$0xff]
        %v1060 = vld [vmem:[%s735 + $0x170] sm:$0xff]
        %v1061 = vld [vmem:[%s735 + $0x178] sm:$0xff]
        %v1062 = vpack.c.bf16 %v1017, %v1014
        %v1063 = vpack.c.bf16 %v1018, %v1015
        %v1064 = vpack.c.bf16 %v1019, %v1016
        %v1065 = vpack.c.bf16 %v1023, %v1020
        %v1066 = vpack.c.bf16 %v1024, %v1021
        %v1067 = vpack.c.bf16 %v1025, %v1022
        %v1068 = vpack.c.bf16 %v1029, %v1026
        %v1069 = vpack.c.bf16 %v1030, %v1027
        %v1070 = vpack.c.bf16 %v1031, %v1028
        %v1071 = vpack.c.bf16 %v1035, %v1032
        %v1072 = vpack.c.bf16 %v1036, %v1033
        %v1073 = vpack.c.bf16 %v1037, %v1034
        %v1074 = vpack.c.bf16 %v1041, %v1038
        %v1075 = vpack.c.bf16 %v1042, %v1039
        %v1076 = vpack.c.bf16 %v1043, %v1040
        %v1077 = vpack.c.bf16 %v1047, %v1044
        %v1078 = vpack.c.bf16 %v1048, %v1045
        %v1079 = vpack.c.bf16 %v1049, %v1046
        %v1080 = vpack.c.bf16 %v1053, %v1050
        %v1081 = vpack.c.bf16 %v1054, %v1051
        %v1082 = vpack.c.bf16 %v1055, %v1052
        %v1083 = vpack.c.bf16 %v1059, %v1056
        %v1084 = vpack.c.bf16 %v1060, %v1057
        %v1085 = vpack.c.bf16 %v1061, %v1058
        %1086 = vmatprep.subr.bf16.mxu0 %v1063
        %1087 = vmatpush1.bf16.msra.mxu0 %v1062
        %1088 = vmatprep.subr.bf16.mxu0 %v1066
        %1089 = vmatpush1.bf16.msra.mxu0 %v1065
        %1090 = vmatprep.subr.bf16.mxu0 %v1069
        %1091 = vmatpush1.bf16.msra.mxu0 %v1068
        %1092 = vmatprep.subr.bf16.mxu0 %v1072
        %1093 = vmatpush1.bf16.msra.mxu0 %v1071
        %1094 = vmatprep.subr.bf16.mxu0 %v1075
        %1095 = vmatpush1.bf16.msra.mxu0 %v1074
        %1096 = vmatprep.subr.bf16.mxu0 %v1078
        %1097 = vmatpush1.bf16.msra.mxu0 %v1077
        %1098 = vmatprep.subr.bf16.mxu0 %v1081
        %1099 = vmatpush1.bf16.msra.mxu0 %v1080
        %1100 = vmatprep.subr.bf16.mxu0 %v1084
        %1101 = vmatpush1.bf16.msra.mxu0 %v1083
        %1102 = vmatprep.subr.bf16.mxu0 0
        %1103 = vmatpush1.bf16.msra.mxu0 0
        %1104 = vmatprep.subr.bf16.mxu0 0
        %1105 = vmatpush1.bf16.msra.mxu0 0
        %1106 = vmatprep.subr.bf16.mxu0 0
        %1107 = vmatpush1.bf16.msra.mxu0 0
        %1108 = vmatprep.subr.bf16.mxu0 0
        %1109 = vmatpush1.bf16.msra.mxu0 0
        %1110 = vmatprep.subr.bf16.mxu0 0
        %1111 = vmatpush1.bf16.msra.mxu0 0
        %1112 = vmatprep.subr.bf16.mxu0 0
        %1113 = vmatpush1.bf16.msra.mxu0 0
        %1114 = vmatprep.subr.bf16.mxu0 0
        %1115 = vmatpush1.bf16.msra.mxu0 0
        %1116 = vmatprep.subr.bf16.mxu0 0
        %1117 = vmatpush1.bf16.msra.mxu0 0
        %1118 = vmatprep.mubr.bf16.mxu0 0
        %1119 = vmatmul.mubr.bf16.gmra.mrb[0].mxu0 %v1013
        %v1120 = vpop.f32.mrb[0].mxu0
        %v1121 = vadd.f32 0.0, %v1120
        %v1122 = vpop.f32.mrb[0].mxu0
        %v1123 = vadd.f32 0.0, %v1122
        %v1124 = vpop.f32.mrb[0].mxu0
        %v1125 = vadd.f32 0.0, %v1124
        %v1126 = vpop.f32.mrb[0].mxu0
        %v1127 = vadd.f32 0.0, %v1126
        %1128 = vdwg.mxu0
        %1129 = vmatprep.subr.bf16.mxu0 0
        %1130 = vmatpush1.bf16.msra.mxu0 %v1064
        %1131 = vmatprep.subr.bf16.mxu0 0
        %1132 = vmatpush1.bf16.msra.mxu0 %v1067
        %1133 = vmatprep.subr.bf16.mxu0 0
        %1134 = vmatpush1.bf16.msra.mxu0 %v1070
        %1135 = vmatprep.subr.bf16.mxu0 0
        %1136 = vmatpush1.bf16.msra.mxu0 %v1073
        %1137 = vmatprep.subr.bf16.mxu0 0
        %1138 = vmatpush1.bf16.msra.mxu0 %v1076
        %1139 = vmatprep.subr.bf16.mxu0 0
        %1140 = vmatpush1.bf16.msra.mxu0 %v1079
        %1141 = vmatprep.subr.bf16.mxu0 0
        %1142 = vmatpush1.bf16.msra.mxu0 %v1082
        %1143 = vmatprep.subr.bf16.mxu0 0
        %1144 = vmatpush1.bf16.msra.mxu0 %v1085
        %1145 = vmatprep.subr.bf16.mxu0 0
        %1146 = vmatpush1.bf16.msra.mxu0 0
        %1147 = vmatprep.subr.bf16.mxu0 0
        %1148 = vmatpush1.bf16.msra.mxu0 0
        %1149 = vmatprep.subr.bf16.mxu0 0
        %1150 = vmatpush1.bf16.msra.mxu0 0
        %1151 = vmatprep.subr.bf16.mxu0 0
        %1152 = vmatpush1.bf16.msra.mxu0 0
        %1153 = vmatprep.subr.bf16.mxu0 0
        %1154 = vmatpush1.bf16.msra.mxu0 0
        %1155 = vmatprep.subr.bf16.mxu0 0
        %1156 = vmatpush1.bf16.msra.mxu0 0
        %1157 = vmatprep.subr.bf16.mxu0 0
        %1158 = vmatpush1.bf16.msra.mxu0 0
        %1159 = vmatprep.subr.bf16.mxu0 0
        %1160 = vmatpush1.bf16.msra.mxu0 0
        %1161 = vmatprep.mubr.bf16.mxu0 0
        %1162 = vmatmul.mubr.bf16.gmra.mrb[0].mxu0 %v1013
        %v1163 = vpop.f32.mrb[0].mxu0
        %v1164 = vadd.f32 0.0, %v1163
        %v1165 = vpop.f32.mrb[0].mxu0
        %v1166 = vpop.f32.mrb[0].mxu0
        %v1167 = vadd.f32 0.0, %v1166
        %v1168 = vpop.f32.mrb[0].mxu0
        %1169 = vdwg.mxu0
        %v1170 = vpack.c.bf16 %v1125, %v1121
        %v1171 = vpack.c.bf16 %v1127, %v1123
        %vm1172 = vcmask 261120
        %v1174 = vsel %vm1172, %v1170, 0
        %v1177 = vsel %vm1172, %v1171, 0
        %1179 = vmatprep.subr.bf16.mxu0 0
        %1180 = vmatpush1.bf16.xpose.msra.mxu0 %v1177
        %1181 = vmatprep.subr.bf16.mxu0 0
        %1182 = vmatpush1.bf16.xpose.msra.mxu0 0
        %1183 = vmatprep.subr.bf16.mxu0 0
        %1184 = vmatpush1.bf16.xpose.msra.mxu0 0
        %1185 = vmatprep.subr.bf16.mxu0 0
        %1186 = vmatpush1.bf16.xpose.msra.mxu0 0
        %1187 = vmatprep.subr.bf16.mxu0 0
        %1188 = vmatpush1.bf16.xpose.msra.mxu0 0
        %1189 = vmatprep.subr.bf16.mxu0 0
        %1190 = vmatpush1.bf16.xpose.msra.mxu0 0
        %1191 = vmatprep.subr.bf16.mxu0 0
        %1192 = vmatpush1.bf16.xpose.msra.mxu0 0
        %1193 = vmatprep.subr.bf16.mxu0 0
        %1194 = vmatpush1.bf16.xpose.msra.mxu0 0
        %1195 = vmatprep.subr.bf16.mxu0 0
        %1196 = vmatpush1.bf16.xpose.msra.mxu0 0
        %1197 = vmatprep.subr.bf16.mxu0 0
        %1198 = vmatpush1.bf16.xpose.msra.mxu0 0
        %1199 = vmatprep.subr.bf16.mxu0 0
        %1200 = vmatpush1.bf16.xpose.msra.mxu0 0
        %1201 = vmatprep.subr.bf16.mxu0 0
        %1202 = vmatpush1.bf16.xpose.msra.mxu0 0
        %1203 = vmatprep.subr.bf16.mxu0 0
        %1204 = vmatpush1.bf16.xpose.msra.mxu0 0
        %1205 = vmatprep.subr.bf16.mxu0 0
        %1206 = vmatpush1.bf16.xpose.msra.mxu0 0
        %1207 = vmatprep.subr.bf16.mxu0 0
        %1208 = vmatpush1.bf16.xpose.msra.mxu0 0
        %1209 = vmatprep.subr.bf16.mxu0 0
        %1210 = vmatpush1.bf16.xpose.msra.mxu0 0
        %1211 = vmatprep.mubr.bf16.mxu0 0
        %1212 = vmatmul.mubr.bf16.gmra.mrb[0].mxu0 %v1174
        %v1213 = vpop.f32.mrb[0].mxu0
        %v1214 = vadd.f32 0.0, %v1213
        %v1215 = vpop.f32.mrb[0].mxu0
        %v1216 = vpop.f32.mrb[0].mxu0
        %v1217 = vadd.f32 0.0, %v1216
        %v1218 = vpop.f32.mrb[0].mxu0
        %1219 = vdwg.mxu0
        %1221 = vrot.lane.b32.xlu0 %v1170, 96
        %v1222 = vpop.permute.xlu0 %1221
        %1224 = vrot.lane.b32.xlu0 %v1171, 96
        %v1225 = vpop.permute.xlu0 %1224
        %v1227 = vsel %vm1172, %v1222, 0
        %v1230 = vsel %vm1172, %v1225, 0
        %1232 = vmatprep.subr.bf16.mxu0 0
        %1233 = vmatpush1.bf16.xpose.msra.mxu0 %v1230
        %1234 = vmatprep.subr.bf16.mxu0 0
        %1235 = vmatpush1.bf16.xpose.msra.mxu0 0
        %1236 = vmatprep.subr.bf16.mxu0 0
        %1237 = vmatpush1.bf16.xpose.msra.mxu0 0
        %1238 = vmatprep.subr.bf16.mxu0 0
        %1239 = vmatpush1.bf16.xpose.msra.mxu0 0
        %1240 = vmatprep.subr.bf16.mxu0 0
        %1241 = vmatpush1.bf16.xpose.msra.mxu0 0
        %1242 = vmatprep.subr.bf16.mxu0 0
        %1243 = vmatpush1.bf16.xpose.msra.mxu0 0
        %1244 = vmatprep.subr.bf16.mxu0 0
        %1245 = vmatpush1.bf16.xpose.msra.mxu0 0
        %1246 = vmatprep.subr.bf16.mxu0 0
        %1247 = vmatpush1.bf16.xpose.msra.mxu0 0
        %1248 = vmatprep.subr.bf16.mxu0 0
        %1249 = vmatpush1.bf16.xpose.msra.mxu0 0
        %1250 = vmatprep.subr.bf16.mxu0 0
        %1251 = vmatpush1.bf16.xpose.msra.mxu0 0
        %1252 = vmatprep.subr.bf16.mxu0 0
        %1253 = vmatpush1.bf16.xpose.msra.mxu0 0
        %1254 = vmatprep.subr.bf16.mxu0 0
        %1255 = vmatpush1.bf16.xpose.msra.mxu0 0
        %1256 = vmatprep.subr.bf16.mxu0 0
        %1257 = vmatpush1.bf16.xpose.msra.mxu0 0
        %1258 = vmatprep.subr.bf16.mxu0 0
        %1259 = vmatpush1.bf16.xpose.msra.mxu0 0
        %1260 = vmatprep.subr.bf16.mxu0 0
        %1261 = vmatpush1.bf16.xpose.msra.mxu0 0
        %1262 = vmatprep.subr.bf16.mxu0 0
        %1263 = vmatpush1.bf16.xpose.msra.mxu0 0
        %1264 = vmatprep.mubr.bf16.mxu0 0
        %1265 = vmatmul.mubr.bf16.gmra.mrb[0].mxu0 %v1227
        %v1266 = vpop.f32.mrb[0].mxu0
        %v1267 = vadd.f32 0.0, %v1266
        %v1268 = vpop.f32.mrb[0].mxu0
        %v1269 = vpop.f32.mrb[0].mxu0
        %v1270 = vadd.f32 0.0, %v1269
        %v1271 = vpop.f32.mrb[0].mxu0
        %1272 = vdwg.mxu0
        %1273 = vrot.lane.b32.xlu0 %v1170, 64
        %v1274 = vpop.permute.xlu0 %1273
        %1275 = vrot.lane.b32.xlu0 %v1171, 64
        %v1276 = vpop.permute.xlu0 %1275
        %v1278 = vsel %vm1172, %v1274, 0
        %v1281 = vsel %vm1172, %v1276, 0
        %1283 = vmatprep.subr.bf16.mxu0 0
        %1284 = vmatpush1.bf16.xpose.msra.mxu0 %v1281
        %1285 = vmatprep.subr.bf16.mxu0 0
        %1286 = vmatpush1.bf16.xpose.msra.mxu0 0
        %1287 = vmatprep.subr.bf16.mxu0 0
        %1288 = vmatpush1.bf16.xpose.msra.mxu0 0
        %1289 = vmatprep.subr.bf16.mxu0 0
        %1290 = vmatpush1.bf16.xpose.msra.mxu0 0
        %1291 = vmatprep.subr.bf16.mxu0 0
        %1292 = vmatpush1.bf16.xpose.msra.mxu0 0
        %1293 = vmatprep.subr.bf16.mxu0 0
        %1294 = vmatpush1.bf16.xpose.msra.mxu0 0
        %1295 = vmatprep.subr.bf16.mxu0 0
        %1296 = vmatpush1.bf16.xpose.msra.mxu0 0
        %1297 = vmatprep.subr.bf16.mxu0 0
        %1298 = vmatpush1.bf16.xpose.msra.mxu0 0
        %1299 = vmatprep.subr.bf16.mxu0 0
        %1300 = vmatpush1.bf16.xpose.msra.mxu0 0
        %1301 = vmatprep.subr.bf16.mxu0 0
        %1302 = vmatpush1.bf16.xpose.msra.mxu0 0
        %1303 = vmatprep.subr.bf16.mxu0 0
        %1304 = vmatpush1.bf16.xpose.msra.mxu0 0
        %1305 = vmatprep.subr.bf16.mxu0 0
        %1306 = vmatpush1.bf16.xpose.msra.mxu0 0
        %1307 = vmatprep.subr.bf16.mxu0 0
        %1308 = vmatpush1.bf16.xpose.msra.mxu0 0
        %1309 = vmatprep.subr.bf16.mxu0 0
        %1310 = vmatpush1.bf16.xpose.msra.mxu0 0
        %1311 = vmatprep.subr.bf16.mxu0 0
        %1312 = vmatpush1.bf16.xpose.msra.mxu0 0
        %1313 = vmatprep.subr.bf16.mxu0 0
        %1314 = vmatpush1.bf16.xpose.msra.mxu0 0
        %1315 = vmatprep.mubr.bf16.mxu0 0
        %1316 = vmatmul.mubr.bf16.gmra.mrb[0].mxu0 %v1278
        %v1317 = vpop.f32.mrb[0].mxu0
        %v1318 = vadd.f32 0.0, %v1317
        %v1319 = vpop.f32.mrb[0].mxu0
        %v1320 = vpop.f32.mrb[0].mxu0
        %v1321 = vadd.f32 0.0, %v1320
        %v1322 = vpop.f32.mrb[0].mxu0
        %1323 = vdwg.mxu0
        %1324 = vrot.lane.b32.xlu0 %v1170, 32
        %v1325 = vpop.permute.xlu0 %1324
        %1326 = vrot.lane.b32.xlu0 %v1171, 32
        %v1327 = vpop.permute.xlu0 %1326
        %v1329 = vsel %vm1172, %v1325, 0
        %v1332 = vsel %vm1172, %v1327, 0
        %1334 = vmatprep.subr.bf16.mxu0 0
        %1335 = vmatpush1.bf16.xpose.msra.mxu0 %v1332
        %1336 = vmatprep.subr.bf16.mxu0 0
        %1337 = vmatpush1.bf16.xpose.msra.mxu0 0
        %1338 = vmatprep.subr.bf16.mxu0 0
        %1339 = vmatpush1.bf16.xpose.msra.mxu0 0
        %1340 = vmatprep.subr.bf16.mxu0 0
        %1341 = vmatpush1.bf16.xpose.msra.mxu0 0
        %1342 = vmatprep.subr.bf16.mxu0 0
        %1343 = vmatpush1.bf16.xpose.msra.mxu0 0
        %1344 = vmatprep.subr.bf16.mxu0 0
        %1345 = vmatpush1.bf16.xpose.msra.mxu0 0
        %1346 = vmatprep.subr.bf16.mxu0 0
        %1347 = vmatpush1.bf16.xpose.msra.mxu0 0
        %1348 = vmatprep.subr.bf16.mxu0 0
        %1349 = vmatpush1.bf16.xpose.msra.mxu0 0
        %1350 = vmatprep.subr.bf16.mxu0 0
        %1351 = vmatpush1.bf16.xpose.msra.mxu0 0
        %1352 = vmatprep.subr.bf16.mxu0 0
        %1353 = vmatpush1.bf16.xpose.msra.mxu0 0
        %1354 = vmatprep.subr.bf16.mxu0 0
        %1355 = vmatpush1.bf16.xpose.msra.mxu0 0
        %1356 = vmatprep.subr.bf16.mxu0 0
        %1357 = vmatpush1.bf16.xpose.msra.mxu0 0
        %1358 = vmatprep.subr.bf16.mxu0 0
        %1359 = vmatpush1.bf16.xpose.msra.mxu0 0
        %1360 = vmatprep.subr.bf16.mxu0 0
        %1361 = vmatpush1.bf16.xpose.msra.mxu0 0
        %1362 = vmatprep.subr.bf16.mxu0 0
        %1363 = vmatpush1.bf16.xpose.msra.mxu0 0
        %1364 = vmatprep.subr.bf16.mxu0 0
        %1365 = vmatpush1.bf16.xpose.msra.mxu0 0
        %1366 = vmatprep.mubr.bf16.mxu0 0
        %1367 = vmatmul.mubr.bf16.gmra.mrb[0].mxu0 %v1329
        %v1368 = vpop.f32.mrb[0].mxu0
        %v1369 = vadd.f32 0.0, %v1368
        %v1370 = vpop.f32.mrb[0].mxu0
        %v1371 = vpop.f32.mrb[0].mxu0
        %v1372 = vadd.f32 0.0, %v1371
        %v1373 = vpop.f32.mrb[0].mxu0
        %1374 = vdwg.mxu0
        %1377 = vrot.lane.b32.xlu0 %v1267, 16
        %v1378 = vpop.permute.xlu0 %1377
        %1379 = vrot.lane.b32.xlu0 %v1270, 16
        %v1380 = vpop.permute.xlu0 %1379
        %1385 = vrot.lane.b32.xlu0 %v1318, 32
        %v1386 = vpop.permute.xlu0 %1385
        %1387 = vrot.lane.b32.xlu0 %v1321, 32
        %v1388 = vpop.permute.xlu0 %1387
        %1393 = vrot.lane.b32.xlu0 %v1369, 48
        %v1394 = vpop.permute.xlu0 %1393
        %1395 = vrot.lane.b32.xlu0 %v1372, 48
        %v1396 = vpop.permute.xlu0 %1395
        %vm1399 = vcmask 130048
        %v1400 = vsel %vm1399, %v1214, %v1378
        %v1401 = vsel %vm1399, %v1217, %v1380
        %v1402 = vsel %vm1172, %v1400, %v1386
        %v1403 = vsel %vm1172, %v1401, %v1388
        %vm1404 = vcmask 392192
        %v1405 = vsel %vm1404, %v1402, %v1394
        %v1406 = vsel %vm1404, %v1403, %v1396
        %v1407 = vmul.f32 %v1405, 0.17677669
        %v1408 = vmul.f32 %v1406, 0.17677669
        %v1409 = vlaneseq
        %v1410 = vand.u32 %v1409, 127
        %vm1411 = vcmp.lt.s32.totalorder %v1410, 9
        %v1412 = vsel %vm1411, 0.0, -1e+30
        %1414 = vrot.lane.b32.xlu0 %v1412, 16
        %v1415 = vpop.permute.xlu0 %1414
        %1417 = vrot.lane.b32.xlu0 %v1412, 32
        %v1418 = vpop.permute.xlu0 %1417
        %1420 = vrot.lane.b32.xlu0 %v1412, 48
        %v1421 = vpop.permute.xlu0 %1420
        %v1423 = vsel %vm1399, %v1412, %v1415
        %v1424 = vsel %vm1172, %v1423, %v1418
        %v1425 = vsel %vm1404, %v1424, %v1421
        %v1426 = vlaneseq
        %v1427 = vshrl.u32 %v1426, 7
        %v1428 = vsub.s32 0, %v1427
        %v1429 = vrot.slane %v1425, %v1428
        %v1430 = vadd.f32 %v1407, %v1429
        %v1431 = vadd.f32 %v1408, %v1429
        %vm1432 = vcmask 523264
        %v1433 = vsel %vm1432, %v1430, -inf
        %1434 = vmax.xlane.f32.xlu0 %v1433
        %v1435 = vpop.xlane.xlu0 %1434
        %v1436 = vsel %vm1432, %v1431, -inf
        %1437 = vmax.xlane.f32.xlu0 %v1436
        %v1438 = vpop.xlane.xlu0 %1437
        %v1439 = vsub.f32 %v1430, %v1435
        %v1440 = vsub.f32 %v1431, %v1438
        %v1441 = vmul.f32 %v1439, 1.442695
        %v1442 = vpow.pop %v1441
        %v1443 = vmul.f32 %v1440, 1.442695
        %v1444 = vpow.pop %v1443
        %v1445 = vld [vmem:[%s740] sm:$0xff]
        %v1446 = vld [vmem:[%s740 + $0x8] sm:$0xff]
        %v1447 = vld [vmem:[%s740 + $0x10] sm:$0xff]
        %v1448 = vld [vmem:[%s740 + $0x18] sm:$0xff]
        %v1449 = vld [vmem:[%s740 + $0x20] sm:$0xff]
        %v1450 = vld [vmem:[%s740 + $0x28] sm:$0xff]
        %v1451 = vld [vmem:[%s740 + $0x30] sm:$0xff]
        %v1452 = vld [vmem:[%s740 + $0x38] sm:$0xff]
        %v1453 = vld [vmem:[%s740 + $0x40] sm:$0xff]
        %v1454 = vld [vmem:[%s740 + $0x48] sm:$0xff]
        %v1455 = vld [vmem:[%s740 + $0x50] sm:$0xff]
        %v1456 = vld [vmem:[%s740 + $0x58] sm:$0xff]
        %v1457 = vld [vmem:[%s740 + $0x60] sm:$0xff]
        %v1458 = vld [vmem:[%s740 + $0x68] sm:$0xff]
        %v1459 = vld [vmem:[%s740 + $0x70] sm:$0xff]
        %v1460 = vld [vmem:[%s740 + $0x78] sm:$0xff]
        %v1461 = vsel %vm1399, %v1442, 0.0
        %1462 = vadd.xlane.f32.xlu0 %v1461
        %v1463 = vpop.xlane.xlu0 %1462
        %v1464 = vsel %vm1399, %v1444, 0.0
        %1465 = vadd.xlane.f32.xlu0 %v1464
        %v1466 = vpop.xlane.xlu0 %1465
        %v1467 = vrcp.pop %v1463
        %v1468 = vrcp.pop %v1466
        %v1469 = vmul.f32 %v1442, %v1467
        %v1470 = vmul.f32 %v1444, %v1468
        %v1471 = vpack.c.bf16 %v1167, %v1164
        %v1472 = vpack.c.bf16 %v1470, %v1469
        %v1474 = vsel %vm1399, %v1472, 0
        %1476 = vmatprep.subr.bf16.mxu0 0
        %1477 = vmatpush1.bf16.msra.mxu0 %v1471
        %1478 = vmatprep.subr.bf16.mxu0 0
        %1479 = vmatpush1.bf16.msra.mxu0 0
        %1480 = vmatprep.subr.bf16.mxu0 0
        %1481 = vmatpush1.bf16.msra.mxu0 0
        %1482 = vmatprep.subr.bf16.mxu0 0
        %1483 = vmatpush1.bf16.msra.mxu0 0
        %1484 = vmatprep.subr.bf16.mxu0 0
        %1485 = vmatpush1.bf16.msra.mxu0 0
        %1486 = vmatprep.subr.bf16.mxu0 0
        %1487 = vmatpush1.bf16.msra.mxu0 0
        %1488 = vmatprep.subr.bf16.mxu0 0
        %1489 = vmatpush1.bf16.msra.mxu0 0
        %1490 = vmatprep.subr.bf16.mxu0 0
        %1491 = vmatpush1.bf16.msra.mxu0 0
        %1492 = vmatprep.subr.bf16.mxu0 0
        %1493 = vmatpush1.bf16.msra.mxu0 0
        %1494 = vmatprep.subr.bf16.mxu0 0
        %1495 = vmatpush1.bf16.msra.mxu0 0
        %1496 = vmatprep.subr.bf16.mxu0 0
        %1497 = vmatpush1.bf16.msra.mxu0 0
        %1498 = vmatprep.subr.bf16.mxu0 0
        %1499 = vmatpush1.bf16.msra.mxu0 0
        %1500 = vmatprep.subr.bf16.mxu0 0
        %1501 = vmatpush1.bf16.msra.mxu0 0
        %1502 = vmatprep.subr.bf16.mxu0 0
        %1503 = vmatpush1.bf16.msra.mxu0 0
        %1504 = vmatprep.subr.bf16.mxu0 0
        %1505 = vmatpush1.bf16.msra.mxu0 0
        %1506 = vmatprep.subr.bf16.mxu0 0
        %1507 = vmatpush1.bf16.msra.mxu0 0
        %1508 = vmatprep.mubr.bf16.mxu0 0
        %1509 = vmatmul.mubr.bf16.gmra.mrb[0].mxu0 %v1474
        %v1510 = vpop.f32.mrb[0].mxu0
        %v1511 = vadd.f32 0.0, %v1510
        %v1512 = vpop.f32.mrb[0].mxu0
        %v1513 = vpop.f32.mrb[0].mxu0
        %v1514 = vadd.f32 0.0, %v1513
        %v1515 = vpop.f32.mrb[0].mxu0
        %1516 = vdwg.mxu0
        %v1517 = vpack.c.bf16 %v1514, %v1511
        %v1518 = vpack.c.bf16 %v1446, %v1445
        %v1519 = vpack.c.bf16 %v1448, %v1447
        %1522 = vrot.lane.b32.xlu0 %v1442, 112
        %v1523 = vpop.permute.xlu0 %1522
        %1524 = vrot.lane.b32.xlu0 %v1444, 112
        %v1525 = vpop.permute.xlu0 %1524
        %v1528 = vsel %vm1399, %v1523, 0.0
        %1529 = vadd.xlane.f32.xlu0 %v1528
        %v1530 = vpop.xlane.xlu0 %1529
        %v1531 = vsel %vm1399, %v1525, 0.0
        %1532 = vadd.xlane.f32.xlu0 %v1531
        %v1533 = vpop.xlane.xlu0 %1532
        %v1534 = vrcp.pop %v1530
        %v1535 = vrcp.pop %v1533
        %v1536 = vmul.f32 %v1442, %v1534
        %v1537 = vmul.f32 %v1444, %v1535
        %v1538 = vpack.c.bf16 %v1537, %v1536
        %1540 = vrot.lane.b32.xlu0 %v1538, 112
        %v1541 = vpop.permute.xlu0 %1540
        %1543 = vrot.lane.b32.xlu0 %v1471, 96
        %v1544 = vpop.permute.xlu0 %1543
        %v1547 = vsel %vm1399, %v1541, 0
        %1549 = vmatprep.subr.bf16.mxu0 0
        %1550 = vmatpush1.bf16.msra.mxu0 %v1544
        %1551 = vmatprep.subr.bf16.mxu0 0
        %1552 = vmatpush1.bf16.msra.mxu0 0
        %1553 = vmatprep.subr.bf16.mxu0 0
        %1554 = vmatpush1.bf16.msra.mxu0 0
        %1555 = vmatprep.subr.bf16.mxu0 0
        %1556 = vmatpush1.bf16.msra.mxu0 0
        %1557 = vmatprep.subr.bf16.mxu0 0
        %1558 = vmatpush1.bf16.msra.mxu0 0
        %1559 = vmatprep.subr.bf16.mxu0 0
        %1560 = vmatpush1.bf16.msra.mxu0 0
        %1561 = vmatprep.subr.bf16.mxu0 0
        %1562 = vmatpush1.bf16.msra.mxu0 0
        %1563 = vmatprep.subr.bf16.mxu0 0
        %1564 = vmatpush1.bf16.msra.mxu0 0
        %1565 = vmatprep.subr.bf16.mxu0 0
        %1566 = vmatpush1.bf16.msra.mxu0 0
        %1567 = vmatprep.subr.bf16.mxu0 0
        %1568 = vmatpush1.bf16.msra.mxu0 0
        %1569 = vmatprep.subr.bf16.mxu0 0
        %1570 = vmatpush1.bf16.msra.mxu0 0
        %1571 = vmatprep.subr.bf16.mxu0 0
        %1572 = vmatpush1.bf16.msra.mxu0 0
        %1573 = vmatprep.subr.bf16.mxu0 0
        %1574 = vmatpush1.bf16.msra.mxu0 0
        %1575 = vmatprep.subr.bf16.mxu0 0
        %1576 = vmatpush1.bf16.msra.mxu0 0
        %1577 = vmatprep.subr.bf16.mxu0 0
        %1578 = vmatpush1.bf16.msra.mxu0 0
        %1579 = vmatprep.subr.bf16.mxu0 0
        %1580 = vmatpush1.bf16.msra.mxu0 0
        %1581 = vmatprep.mubr.bf16.mxu0 0
        %1582 = vmatmul.mubr.bf16.gmra.mrb[0].mxu0 %v1547
        %v1583 = vpop.f32.mrb[0].mxu0
        %v1584 = vadd.f32 0.0, %v1583
        %v1585 = vpop.f32.mrb[0].mxu0
        %v1586 = vpop.f32.mrb[0].mxu0
        %v1587 = vadd.f32 0.0, %v1586
        %v1588 = vpop.f32.mrb[0].mxu0
        %1589 = vdwg.mxu0
        %v1590 = vpack.c.bf16 %v1587, %v1584
        %v1591 = vpack.c.bf16 %v1450, %v1449
        %v1592 = vpack.c.bf16 %v1452, %v1451
        %v1594 = vsel %vm1172, %v1590, 0
        %1596 = vmatprep.subr.bf16.mxu0 0
        %1597 = vmatpush1.bf16.msra.mxu0 %v1591
        %1598 = vmatprep.subr.bf16.mxu0 0
        %1599 = vmatpush1.bf16.msra.mxu0 %v1592
        %1600 = vmatprep.subr.bf16.mxu0 0
        %1601 = vmatpush1.bf16.msra.mxu0 0
        %1602 = vmatprep.subr.bf16.mxu0 0
        %1603 = vmatpush1.bf16.msra.mxu0 0
        %1604 = vmatprep.subr.bf16.mxu0 0
        %1605 = vmatpush1.bf16.msra.mxu0 0
        %1606 = vmatprep.subr.bf16.mxu0 0
        %1607 = vmatpush1.bf16.msra.mxu0 0
        %1608 = vmatprep.subr.bf16.mxu0 0
        %1609 = vmatpush1.bf16.msra.mxu0 0
        %1610 = vmatprep.subr.bf16.mxu0 0
        %1611 = vmatpush1.bf16.msra.mxu0 0
        %1612 = vmatprep.subr.bf16.mxu0 0
        %1613 = vmatpush1.bf16.msra.mxu0 0
        %1614 = vmatprep.subr.bf16.mxu0 0
        %1615 = vmatpush1.bf16.msra.mxu0 0
        %1616 = vmatprep.subr.bf16.mxu0 0
        %1617 = vmatpush1.bf16.msra.mxu0 0
        %1618 = vmatprep.subr.bf16.mxu0 0
        %1619 = vmatpush1.bf16.msra.mxu0 0
        %1620 = vmatprep.subr.bf16.mxu0 0
        %1621 = vmatpush1.bf16.msra.mxu0 0
        %1622 = vmatprep.subr.bf16.mxu0 0
        %1623 = vmatpush1.bf16.msra.mxu0 0
        %1624 = vmatprep.subr.bf16.mxu0 0
        %1625 = vmatpush1.bf16.msra.mxu0 0
        %1626 = vmatprep.subr.bf16.mxu0 0
        %1627 = vmatpush1.bf16.msra.mxu0 0
        %1628 = vmatprep.mubr.bf16.mxu0 0
        %1629 = vmatmul.mubr.bf16.gmra.mrb[0].mxu0 %v1594
        %v1630 = vpop.f32.mrb[0].mxu0
        %v1631 = vadd.f32 0.0, %v1630
        %v1632 = vpop.f32.mrb[0].mxu0
        %v1633 = vpop.f32.mrb[0].mxu0
        %v1634 = vadd.f32 0.0, %v1633
        %v1635 = vpop.f32.mrb[0].mxu0
        %1636 = vdwg.mxu0
        %v1638 = vsel %vm1172, %v1517, 0
        %1640 = vmatprep.subr.bf16.mxu0 0
        %1641 = vmatpush1.bf16.msra.mxu0 %v1518
        %1642 = vmatprep.subr.bf16.mxu0 0
        %1643 = vmatpush1.bf16.msra.mxu0 %v1519
        %1644 = vmatprep.subr.bf16.mxu0 0
        %1645 = vmatpush1.bf16.msra.mxu0 0
        %1646 = vmatprep.subr.bf16.mxu0 0
        %1647 = vmatpush1.bf16.msra.mxu0 0
        %1648 = vmatprep.subr.bf16.mxu0 0
        %1649 = vmatpush1.bf16.msra.mxu0 0
        %1650 = vmatprep.subr.bf16.mxu0 0
        %1651 = vmatpush1.bf16.msra.mxu0 0
        %1652 = vmatprep.subr.bf16.mxu0 0
        %1653 = vmatpush1.bf16.msra.mxu0 0
        %1654 = vmatprep.subr.bf16.mxu0 0
        %1655 = vmatpush1.bf16.msra.mxu0 0
        %1656 = vmatprep.subr.bf16.mxu0 0
        %1657 = vmatpush1.bf16.msra.mxu0 0
        %1658 = vmatprep.subr.bf16.mxu0 0
        %1659 = vmatpush1.bf16.msra.mxu0 0
        %1660 = vmatprep.subr.bf16.mxu0 0
        %1661 = vmatpush1.bf16.msra.mxu0 0
        %1662 = vmatprep.subr.bf16.mxu0 0
        %1663 = vmatpush1.bf16.msra.mxu0 0
        %1664 = vmatprep.subr.bf16.mxu0 0
        %1665 = vmatpush1.bf16.msra.mxu0 0
        %1666 = vmatprep.subr.bf16.mxu0 0
        %1667 = vmatpush1.bf16.msra.mxu0 0
        %1668 = vmatprep.subr.bf16.mxu0 0
        %1669 = vmatpush1.bf16.msra.mxu0 0
        %1670 = vmatprep.subr.bf16.mxu0 0
        %1671 = vmatpush1.bf16.msra.mxu0 0
        %1672 = vmatprep.mubr.bf16.mxu0 0
        %1673 = vmatmul.mubr.bf16.gmra.mrb[0].mxu0 %v1638
        %v1674 = vpop.f32.mrb[0].mxu0
        %v1675 = vadd.f32 %v1631, %v1674
        %v1676 = vpop.f32.mrb[0].mxu0
        %v1677 = vpop.f32.mrb[0].mxu0
        %v1678 = vadd.f32 %v1634, %v1677
        %v1679 = vpop.f32.mrb[0].mxu0
        %1680 = vdwg.mxu0
        %1681 = vrot.lane.b32.xlu0 %v1442, 96
        %v1682 = vpop.permute.xlu0 %1681
        %1683 = vrot.lane.b32.xlu0 %v1444, 96
        %v1684 = vpop.permute.xlu0 %1683
        %v1687 = vsel %vm1399, %v1682, 0.0
        %1688 = vadd.xlane.f32.xlu0 %v1687
        %v1689 = vpop.xlane.xlu0 %1688
        %v1690 = vsel %vm1399, %v1684, 0.0
        %1691 = vadd.xlane.f32.xlu0 %v1690
        %v1692 = vpop.xlane.xlu0 %1691
        %v1693 = vrcp.pop %v1689
        %v1694 = vrcp.pop %v1692
        %v1695 = vmul.f32 %v1442, %v1693
        %v1696 = vmul.f32 %v1444, %v1694
        %v1697 = vpack.c.bf16 %v1696, %v1695
        %1699 = vrot.lane.b32.xlu0 %v1697, 96
        %v1700 = vpop.permute.xlu0 %1699
        %1701 = vrot.lane.b32.xlu0 %v1471, 64
        %v1702 = vpop.permute.xlu0 %1701
        %v1705 = vsel %vm1399, %v1700, 0
        %1707 = vmatprep.subr.bf16.mxu0 0
        %1708 = vmatpush1.bf16.msra.mxu0 %v1702
        %1709 = vmatprep.subr.bf16.mxu0 0
        %1710 = vmatpush1.bf16.msra.mxu0 0
        %1711 = vmatprep.subr.bf16.mxu0 0
        %1712 = vmatpush1.bf16.msra.mxu0 0
        %1713 = vmatprep.subr.bf16.mxu0 0
        %1714 = vmatpush1.bf16.msra.mxu0 0
        %1715 = vmatprep.subr.bf16.mxu0 0
        %1716 = vmatpush1.bf16.msra.mxu0 0
        %1717 = vmatprep.subr.bf16.mxu0 0
        %1718 = vmatpush1.bf16.msra.mxu0 0
        %1719 = vmatprep.subr.bf16.mxu0 0
        %1720 = vmatpush1.bf16.msra.mxu0 0
        %1721 = vmatprep.subr.bf16.mxu0 0
        %1722 = vmatpush1.bf16.msra.mxu0 0
        %1723 = vmatprep.subr.bf16.mxu0 0
        %1724 = vmatpush1.bf16.msra.mxu0 0
        %1725 = vmatprep.subr.bf16.mxu0 0
        %1726 = vmatpush1.bf16.msra.mxu0 0
        %1727 = vmatprep.subr.bf16.mxu0 0
        %1728 = vmatpush1.bf16.msra.mxu0 0
        %1729 = vmatprep.subr.bf16.mxu0 0
        %1730 = vmatpush1.bf16.msra.mxu0 0
        %1731 = vmatprep.subr.bf16.mxu0 0
        %1732 = vmatpush1.bf16.msra.mxu0 0
        %1733 = vmatprep.subr.bf16.mxu0 0
        %1734 = vmatpush1.bf16.msra.mxu0 0
        %1735 = vmatprep.subr.bf16.mxu0 0
        %1736 = vmatpush1.bf16.msra.mxu0 0
        %1737 = vmatprep.subr.bf16.mxu0 0
        %1738 = vmatpush1.bf16.msra.mxu0 0
        %1739 = vmatprep.mubr.bf16.mxu0 0
        %1740 = vmatmul.mubr.bf16.gmra.mrb[0].mxu0 %v1705
        %v1741 = vpop.f32.mrb[0].mxu0
        %v1742 = vadd.f32 0.0, %v1741
        %v1743 = vpop.f32.mrb[0].mxu0
        %v1744 = vpop.f32.mrb[0].mxu0
        %v1745 = vadd.f32 0.0, %v1744
        %v1746 = vpop.f32.mrb[0].mxu0
        %1747 = vdwg.mxu0
        %v1748 = vpack.c.bf16 %v1745, %v1742
        %v1749 = vpack.c.bf16 %v1454, %v1453
        %v1750 = vpack.c.bf16 %v1456, %v1455
        %v1752 = vsel %vm1172, %v1748, 0
        %1754 = vmatprep.subr.bf16.mxu0 0
        %1755 = vmatpush1.bf16.msra.mxu0 %v1749
        %1756 = vmatprep.subr.bf16.mxu0 0
        %1757 = vmatpush1.bf16.msra.mxu0 %v1750
        %1758 = vmatprep.subr.bf16.mxu0 0
        %1759 = vmatpush1.bf16.msra.mxu0 0
        %1760 = vmatprep.subr.bf16.mxu0 0
        %1761 = vmatpush1.bf16.msra.mxu0 0
        %1762 = vmatprep.subr.bf16.mxu0 0
        %1763 = vmatpush1.bf16.msra.mxu0 0
        %1764 = vmatprep.subr.bf16.mxu0 0
        %1765 = vmatpush1.bf16.msra.mxu0 0
        %1766 = vmatprep.subr.bf16.mxu0 0
        %1767 = vmatpush1.bf16.msra.mxu0 0
        %1768 = vmatprep.subr.bf16.mxu0 0
        %1769 = vmatpush1.bf16.msra.mxu0 0
        %1770 = vmatprep.subr.bf16.mxu0 0
        %1771 = vmatpush1.bf16.msra.mxu0 0
        %1772 = vmatprep.subr.bf16.mxu0 0
        %1773 = vmatpush1.bf16.msra.mxu0 0
        %1774 = vmatprep.subr.bf16.mxu0 0
        %1775 = vmatpush1.bf16.msra.mxu0 0
        %1776 = vmatprep.subr.bf16.mxu0 0
        %1777 = vmatpush1.bf16.msra.mxu0 0
        %1778 = vmatprep.subr.bf16.mxu0 0
        %1779 = vmatpush1.bf16.msra.mxu0 0
        %1780 = vmatprep.subr.bf16.mxu0 0
        %1781 = vmatpush1.bf16.msra.mxu0 0
        %1782 = vmatprep.subr.bf16.mxu0 0
        %1783 = vmatpush1.bf16.msra.mxu0 0
        %1784 = vmatprep.subr.bf16.mxu0 0
        %1785 = vmatpush1.bf16.msra.mxu0 0
        %1786 = vmatprep.mubr.bf16.mxu0 0
        %1787 = vmatmul.mubr.bf16.gmra.mrb[0].mxu0 %v1752
        %v1788 = vpop.f32.mrb[0].mxu0
        %v1789 = vadd.f32 0.0, %v1788
        %v1790 = vpop.f32.mrb[0].mxu0
        %v1791 = vpop.f32.mrb[0].mxu0
        %v1792 = vadd.f32 0.0, %v1791
        %v1793 = vpop.f32.mrb[0].mxu0
        %1794 = vdwg.mxu0
        %v1795 = vadd.f32 %v1675, %v1789
        %v1796 = vadd.f32 %v1678, %v1792
        %1797 = vrot.lane.b32.xlu0 %v1442, 80
        %v1798 = vpop.permute.xlu0 %1797
        %1799 = vrot.lane.b32.xlu0 %v1444, 80
        %v1800 = vpop.permute.xlu0 %1799
        %v1803 = vsel %vm1399, %v1798, 0.0
        %1804 = vadd.xlane.f32.xlu0 %v1803
        %v1805 = vpop.xlane.xlu0 %1804
        %v1806 = vsel %vm1399, %v1800, 0.0
        %1807 = vadd.xlane.f32.xlu0 %v1806
        %v1808 = vpop.xlane.xlu0 %1807
        %v1809 = vrcp.pop %v1805
        %v1810 = vrcp.pop %v1808
        %v1811 = vmul.f32 %v1442, %v1809
        %v1812 = vmul.f32 %v1444, %v1810
        %v1813 = vpack.c.bf16 %v1812, %v1811
        %1815 = vrot.lane.b32.xlu0 %v1813, 80
        %v1816 = vpop.permute.xlu0 %1815
        %1817 = vrot.lane.b32.xlu0 %v1471, 32
        %v1818 = vpop.permute.xlu0 %1817
        %v1821 = vsel %vm1399, %v1816, 0
        %1823 = vmatprep.subr.bf16.mxu0 0
        %1824 = vmatpush1.bf16.msra.mxu0 %v1818
        %1825 = vmatprep.subr.bf16.mxu0 0
        %1826 = vmatpush1.bf16.msra.mxu0 0
        %1827 = vmatprep.subr.bf16.mxu0 0
        %1828 = vmatpush1.bf16.msra.mxu0 0
        %1829 = vmatprep.subr.bf16.mxu0 0
        %1830 = vmatpush1.bf16.msra.mxu0 0
        %1831 = vmatprep.subr.bf16.mxu0 0
        %1832 = vmatpush1.bf16.msra.mxu0 0
        %1833 = vmatprep.subr.bf16.mxu0 0
        %1834 = vmatpush1.bf16.msra.mxu0 0
        %1835 = vmatprep.subr.bf16.mxu0 0
        %1836 = vmatpush1.bf16.msra.mxu0 0
        %1837 = vmatprep.subr.bf16.mxu0 0
        %1838 = vmatpush1.bf16.msra.mxu0 0
        %1839 = vmatprep.subr.bf16.mxu0 0
        %1840 = vmatpush1.bf16.msra.mxu0 0
        %1841 = vmatprep.subr.bf16.mxu0 0
        %1842 = vmatpush1.bf16.msra.mxu0 0
        %1843 = vmatprep.subr.bf16.mxu0 0
        %1844 = vmatpush1.bf16.msra.mxu0 0
        %1845 = vmatprep.subr.bf16.mxu0 0
        %1846 = vmatpush1.bf16.msra.mxu0 0
        %1847 = vmatprep.subr.bf16.mxu0 0
        %1848 = vmatpush1.bf16.msra.mxu0 0
        %1849 = vmatprep.subr.bf16.mxu0 0
        %1850 = vmatpush1.bf16.msra.mxu0 0
        %1851 = vmatprep.subr.bf16.mxu0 0
        %1852 = vmatpush1.bf16.msra.mxu0 0
        %1853 = vmatprep.subr.bf16.mxu0 0
        %1854 = vmatpush1.bf16.msra.mxu0 0
        %1855 = vmatprep.mubr.bf16.mxu0 0
        %1856 = vmatmul.mubr.bf16.gmra.mrb[0].mxu0 %v1821
        %v1857 = vpop.f32.mrb[0].mxu0
        %v1858 = vadd.f32 0.0, %v1857
        %v1859 = vpop.f32.mrb[0].mxu0
        %v1860 = vpop.f32.mrb[0].mxu0
        %v1861 = vadd.f32 0.0, %v1860
        %v1862 = vpop.f32.mrb[0].mxu0
        %1863 = vdwg.mxu0
        %v1864 = vpack.c.bf16 %v1861, %v1858
        %v1865 = vpack.c.bf16 %v1458, %v1457
        %v1866 = vpack.c.bf16 %v1460, %v1459
        %v1868 = vsel %vm1172, %v1864, 0
        %1870 = vmatprep.subr.bf16.mxu0 0
        %1871 = vmatpush1.bf16.msra.mxu0 %v1865
        %1872 = vmatprep.subr.bf16.mxu0 0
        %1873 = vmatpush1.bf16.msra.mxu0 %v1866
        %1874 = vmatprep.subr.bf16.mxu0 0
        %1875 = vmatpush1.bf16.msra.mxu0 0
        %1876 = vmatprep.subr.bf16.mxu0 0
        %1877 = vmatpush1.bf16.msra.mxu0 0
        %1878 = vmatprep.subr.bf16.mxu0 0
        %1879 = vmatpush1.bf16.msra.mxu0 0
        %1880 = vmatprep.subr.bf16.mxu0 0
        %1881 = vmatpush1.bf16.msra.mxu0 0
        %1882 = vmatprep.subr.bf16.mxu0 0
        %1883 = vmatpush1.bf16.msra.mxu0 0
        %1884 = vmatprep.subr.bf16.mxu0 0
        %1885 = vmatpush1.bf16.msra.mxu0 0
        %1886 = vmatprep.subr.bf16.mxu0 0
        %1887 = vmatpush1.bf16.msra.mxu0 0
        %1888 = vmatprep.subr.bf16.mxu0 0
        %1889 = vmatpush1.bf16.msra.mxu0 0
        %1890 = vmatprep.subr.bf16.mxu0 0
        %1891 = vmatpush1.bf16.msra.mxu0 0
        %1892 = vmatprep.subr.bf16.mxu0 0
        %1893 = vmatpush1.bf16.msra.mxu0 0
        %1894 = vmatprep.subr.bf16.mxu0 0
        %1895 = vmatpush1.bf16.msra.mxu0 0
        %1896 = vmatprep.subr.bf16.mxu0 0
        %1897 = vmatpush1.bf16.msra.mxu0 0
        %1898 = vmatprep.subr.bf16.mxu0 0
        %1899 = vmatpush1.bf16.msra.mxu0 0
        %1900 = vmatprep.subr.bf16.mxu0 0
        %1901 = vmatpush1.bf16.msra.mxu0 0
        %1902 = vmatprep.mubr.bf16.mxu0 0
        %1903 = vmatmul.mubr.bf16.gmra.mrb[0].mxu0 %v1868
        %v1904 = vpop.f32.mrb[0].mxu0
        %v1905 = vadd.f32 0.0, %v1904
        %v1906 = vpop.f32.mrb[0].mxu0
        %v1907 = vpop.f32.mrb[0].mxu0
        %v1908 = vadd.f32 0.0, %v1907
        %v1909 = vpop.f32.mrb[0].mxu0
        %1910 = vdwg.mxu0
        %v1911 = vadd.f32 %v1795, %v1905
        %v1912 = vadd.f32 %v1796, %v1908
        %v1913 = vadd.f32 %v970, %v1911
        %v1914 = vadd.f32 %v971, %v1912
        %v1915 = vld [vmem:[%s743] sm:$0x1]
        %v1917 = vlaneseq
        %v1918 = vshrl.u32 %v1917, 7
        %v1919 = vsub.s32 0, %v1918
        %v1920 = vrot.slane %v1915, %v1919
        %v1922 = vadd.f32 %v1913, %v1920
        %v1923 = vadd.f32 %v1914, %v1920
        %v1924 = vld [vmem:[%s746] sm:$0x1]
        %v1925 = vld [vmem:[%s749] sm:$0x1]
        %1926 = vadd.xlane.f32.xlu0 %v1922
        %v1927 = vpop.xlane.xlu0 %1926
        %1928 = vadd.xlane.f32.xlu0 %v1923
        %v1929 = vpop.xlane.xlu0 %1928
        %v1930 = vmul.f32 %v1927, %v978
        %v1931 = vmul.f32 %v1929, %v978
        %v1932 = vsub.f32 %v1922, %v1930
        %v1933 = vsub.f32 %v1923, %v1931
        %v1934 = vmul.f32 %v1932, %v1932
        %v1935 = vmul.f32 %v1933, %v1933
        %1936 = vadd.xlane.f32.xlu0 %v1934
        %v1937 = vpop.xlane.xlu0 %1936
        %1938 = vadd.xlane.f32.xlu0 %v1935
        %v1939 = vpop.xlane.xlu0 %1938
        %v1940 = vmul.f32 %v1937, %v978
        %v1941 = vmul.f32 %v1939, %v978
        %v1942 = vadd.f32 %v1940, 1e-05
        %v1943 = vadd.f32 %v1941, 1e-05
        %v1944 = vrsqrt.pop %v1942
        %v1945 = vrsqrt.pop %v1943
        %v1946 = vmul.f32 %v1932, %v1944
        %v1947 = vmul.f32 %v1933, %v1945
        %v1949 = vlaneseq
        %v1950 = vshrl.u32 %v1949, 7
        %v1951 = vsub.s32 0, %v1950
        %v1952 = vrot.slane %v1924, %v1951
        %v1954 = vmul.f32 %v1946, %v1952
        %v1955 = vmul.f32 %v1947, %v1952
        %v1957 = vlaneseq
        %v1958 = vshrl.u32 %v1957, 7
        %v1959 = vsub.s32 0, %v1958
        %v1960 = vrot.slane %v1925, %v1959
        %v1962 = vadd.f32 %v1954, %v1960
        %v1963 = vadd.f32 %v1955, %v1960
        %v1964 = vpack.c.bf16 %v1963, %v1962
        %v1965 = vld [vmem:[%s754] sm:$0xff]
        %v1966 = vld [vmem:[%s754 + $0x8] sm:$0xff]
        %v1967 = vld [vmem:[%s754 + $0x10] sm:$0xff]
        %v1968 = vld [vmem:[%s754 + $0x18] sm:$0xff]
        %v1969 = vld [vmem:[%s754 + $0x20] sm:$0xff]
        %v1970 = vld [vmem:[%s754 + $0x28] sm:$0xff]
        %v1971 = vld [vmem:[%s754 + $0x30] sm:$0xff]
        %v1972 = vld [vmem:[%s754 + $0x38] sm:$0xff]
        %v1973 = vld [vmem:[%s754 + $0x40] sm:$0xff]
        %v1974 = vld [vmem:[%s754 + $0x48] sm:$0xff]
        %v1975 = vld [vmem:[%s754 + $0x50] sm:$0xff]
        %v1976 = vld [vmem:[%s754 + $0x58] sm:$0xff]
        %v1977 = vld [vmem:[%s754 + $0x60] sm:$0xff]
        %v1978 = vld [vmem:[%s754 + $0x68] sm:$0xff]
        %v1979 = vld [vmem:[%s754 + $0x70] sm:$0xff]
        %v1980 = vld [vmem:[%s754 + $0x78] sm:$0xff]
        %v1981 = vld [vmem:[%s754 + $0x80] sm:$0xff]
        %v1982 = vld [vmem:[%s754 + $0x88] sm:$0xff]
        %v1983 = vld [vmem:[%s754 + $0x90] sm:$0xff]
        %v1984 = vld [vmem:[%s754 + $0x98] sm:$0xff]
        %v1985 = vld [vmem:[%s754 + $0xa0] sm:$0xff]
        %v1986 = vld [vmem:[%s754 + $0xa8] sm:$0xff]
        %v1987 = vld [vmem:[%s754 + $0xb0] sm:$0xff]
        %v1988 = vld [vmem:[%s754 + $0xb8] sm:$0xff]
        %v1989 = vld [vmem:[%s754 + $0xc0] sm:$0xff]
        %v1990 = vld [vmem:[%s754 + $0xc8] sm:$0xff]
        %v1991 = vld [vmem:[%s754 + $0xd0] sm:$0xff]
        %v1992 = vld [vmem:[%s754 + $0xd8] sm:$0xff]
        %v1993 = vld [vmem:[%s754 + $0xe0] sm:$0xff]
        %v1994 = vld [vmem:[%s754 + $0xe8] sm:$0xff]
        %v1995 = vld [vmem:[%s754 + $0xf0] sm:$0xff]
        %v1996 = vld [vmem:[%s754 + $0xf8] sm:$0xff]
        %v1997 = vpack.c.bf16 %v1967, %v1965
        %v1998 = vpack.c.bf16 %v1968, %v1966
        %v1999 = vpack.c.bf16 %v1971, %v1969
        %v2000 = vpack.c.bf16 %v1972, %v1970
        %v2001 = vpack.c.bf16 %v1975, %v1973
        %v2002 = vpack.c.bf16 %v1976, %v1974
        %v2003 = vpack.c.bf16 %v1979, %v1977
        %v2004 = vpack.c.bf16 %v1980, %v1978
        %v2005 = vpack.c.bf16 %v1983, %v1981
        %v2006 = vpack.c.bf16 %v1984, %v1982
        %v2007 = vpack.c.bf16 %v1987, %v1985
        %v2008 = vpack.c.bf16 %v1988, %v1986
        %v2009 = vpack.c.bf16 %v1991, %v1989
        %v2010 = vpack.c.bf16 %v1992, %v1990
        %v2011 = vpack.c.bf16 %v1995, %v1993
        %v2012 = vpack.c.bf16 %v1996, %v1994
        %v2013 = vld [vmem:[%s758] sm:$0x3]
        %v2015 = vlaneseq
        %v2016 = vshrl.u32 %v2015, 7
        %v2017 = vsub.s32 0, %v2016
        %v2018 = vrot.slane %v2013, %v2017
        %v2019 = vlaneseq
        %v2020 = vshrl.u32 %v2019, 7
        %v2021 = vsub.s32 1, %v2020
        %v2022 = vrot.slane %v2013, %v2021
        %2025 = vmatprep.subr.bf16.mxu0 %v1998
        %2026 = vmatpush1.bf16.msra.mxu0 %v1997
        %2027 = vmatprep.subr.bf16.mxu0 %v2000
        %2028 = vmatpush1.bf16.msra.mxu0 %v1999
        %2029 = vmatprep.subr.bf16.mxu0 %v2002
        %2030 = vmatpush1.bf16.msra.mxu0 %v2001
        %2031 = vmatprep.subr.bf16.mxu0 %v2004
        %2032 = vmatpush1.bf16.msra.mxu0 %v2003
        %2033 = vmatprep.subr.bf16.mxu0 %v2006
        %2034 = vmatpush1.bf16.msra.mxu0 %v2005
        %2035 = vmatprep.subr.bf16.mxu0 %v2008
        %2036 = vmatpush1.bf16.msra.mxu0 %v2007
        %2037 = vmatprep.subr.bf16.mxu0 %v2010
        %2038 = vmatpush1.bf16.msra.mxu0 %v2009
        %2039 = vmatprep.subr.bf16.mxu0 %v2012
        %2040 = vmatpush1.bf16.msra.mxu0 %v2011
        %2041 = vmatprep.subr.bf16.mxu0 0
        %2042 = vmatpush1.bf16.msra.mxu0 0
        %2043 = vmatprep.subr.bf16.mxu0 0
        %2044 = vmatpush1.bf16.msra.mxu0 0
        %2045 = vmatprep.subr.bf16.mxu0 0
        %2046 = vmatpush1.bf16.msra.mxu0 0
        %2047 = vmatprep.subr.bf16.mxu0 0
        %2048 = vmatpush1.bf16.msra.mxu0 0
        %2049 = vmatprep.subr.bf16.mxu0 0
        %2050 = vmatpush1.bf16.msra.mxu0 0
        %2051 = vmatprep.subr.bf16.mxu0 0
        %2052 = vmatpush1.bf16.msra.mxu0 0
        %2053 = vmatprep.subr.bf16.mxu0 0
        %2054 = vmatpush1.bf16.msra.mxu0 0
        %2055 = vmatprep.subr.bf16.mxu0 0
        %2056 = vmatpush1.bf16.msra.mxu0 0
        %2057 = vmatprep.mubr.bf16.mxu0 0
        %2058 = vmatmul.mubr.bf16.gmra.mrb[0].mxu0 %v1964
        %v2059 = vpop.f32.mrb[0].mxu0
        %v2060 = vadd.f32 %v2018, %v2059
        %v2061 = vpop.f32.mrb[0].mxu0
        %v2062 = vadd.f32 %v2022, %v2061
        %v2063 = vpop.f32.mrb[0].mxu0
        %v2064 = vadd.f32 %v2018, %v2063
        %v2065 = vpop.f32.mrb[0].mxu0
        %v2066 = vadd.f32 %v2022, %v2065
        %2067 = vdwg.mxu0
        %v2068 = vmul.f32 %v2060, 0.5
        %v2069 = vmul.f32 %v2062, 0.5
        %v2070 = vmul.f32 %v2064, 0.5
        %v2071 = vmul.f32 %v2066, 0.5
        %v2072 = vmul.f32 %v2060, 0.70710677
        %v2073 = vmul.f32 %v2062, 0.70710677
        %v2074 = vmul.f32 %v2064, 0.70710677
        %v2075 = vmul.f32 %v2066, 0.70710677
        %v2076 = verf.f32.pop %v2072
        %v2077 = verf.f32.pop %v2073
        %v2078 = verf.f32.pop %v2074
        %v2079 = verf.f32.pop %v2075
        %v2080 = vadd.f32 %v2076, 1.0
        %v2081 = vadd.f32 %v2077, 1.0
        %v2082 = vadd.f32 %v2078, 1.0
        %v2083 = vadd.f32 %v2079, 1.0
        %v2084 = vmul.f32 %v2068, %v2080
        %v2085 = vmul.f32 %v2069, %v2081
        %v2086 = vmul.f32 %v2070, %v2082
        %v2087 = vmul.f32 %v2071, %v2083
        %v2088 = vpack.c.bf16 %v2086, %v2084
        %v2089 = vpack.c.bf16 %v2087, %v2085
        %v2090 = vld [vmem:[%s763] sm:$0xff]
        %v2091 = vld [vmem:[%s763 + $0x8] sm:$0xff]
        %v2092 = vld [vmem:[%s763 + $0x10] sm:$0xff]
        %v2093 = vld [vmem:[%s763 + $0x18] sm:$0xff]
        %v2094 = vld [vmem:[%s763 + $0x20] sm:$0xff]
        %v2095 = vld [vmem:[%s763 + $0x28] sm:$0xff]
        %v2096 = vld [vmem:[%s763 + $0x30] sm:$0xff]
        %v2097 = vld [vmem:[%s763 + $0x38] sm:$0xff]
        %v2098 = vld [vmem:[%s763 + $0x40] sm:$0xff]
        %v2099 = vld [vmem:[%s763 + $0x48] sm:$0xff]
        %v2100 = vld [vmem:[%s763 + $0x50] sm:$0xff]
        %v2101 = vld [vmem:[%s763 + $0x58] sm:$0xff]
        %v2102 = vld [vmem:[%s763 + $0x60] sm:$0xff]
        %v2103 = vld [vmem:[%s763 + $0x68] sm:$0xff]
        %v2104 = vld [vmem:[%s763 + $0x70] sm:$0xff]
        %v2105 = vld [vmem:[%s763 + $0x78] sm:$0xff]
        %v2106 = vld [vmem:[%s763 + $0x80] sm:$0xff]
        %v2107 = vld [vmem:[%s763 + $0x88] sm:$0xff]
        %v2108 = vld [vmem:[%s763 + $0x90] sm:$0xff]
        %v2109 = vld [vmem:[%s763 + $0x98] sm:$0xff]
        %v2110 = vld [vmem:[%s763 + $0xa0] sm:$0xff]
        %v2111 = vld [vmem:[%s763 + $0xa8] sm:$0xff]
        %v2112 = vld [vmem:[%s763 + $0xb0] sm:$0xff]
        %v2113 = vld [vmem:[%s763 + $0xb8] sm:$0xff]
        %v2114 = vld [vmem:[%s763 + $0xc0] sm:$0xff]
        %v2115 = vld [vmem:[%s763 + $0xc8] sm:$0xff]
        %v2116 = vld [vmem:[%s763 + $0xd0] sm:$0xff]
        %v2117 = vld [vmem:[%s763 + $0xd8] sm:$0xff]
        %v2118 = vld [vmem:[%s763 + $0xe0] sm:$0xff]
        %v2119 = vld [vmem:[%s763 + $0xe8] sm:$0xff]
        %v2120 = vld [vmem:[%s763 + $0xf0] sm:$0xff]
        %v2121 = vld [vmem:[%s763 + $0xf8] sm:$0xff]
        %v2122 = vpack.c.bf16 %v2091, %v2090
        %v2123 = vpack.c.bf16 %v2093, %v2092
        %v2124 = vpack.c.bf16 %v2095, %v2094
        %v2125 = vpack.c.bf16 %v2097, %v2096
        %v2126 = vpack.c.bf16 %v2099, %v2098
        %v2127 = vpack.c.bf16 %v2101, %v2100
        %v2128 = vpack.c.bf16 %v2103, %v2102
        %v2129 = vpack.c.bf16 %v2105, %v2104
        %v2130 = vpack.c.bf16 %v2107, %v2106
        %v2131 = vpack.c.bf16 %v2109, %v2108
        %v2132 = vpack.c.bf16 %v2111, %v2110
        %v2133 = vpack.c.bf16 %v2113, %v2112
        %v2134 = vpack.c.bf16 %v2115, %v2114
        %v2135 = vpack.c.bf16 %v2117, %v2116
        %v2136 = vpack.c.bf16 %v2119, %v2118
        %v2137 = vpack.c.bf16 %v2121, %v2120
        %v2138 = vld [vmem:[%s766] sm:$0x1]
        %v2140 = vlaneseq
        %v2141 = vshrl.u32 %v2140, 7
        %v2142 = vsub.s32 0, %v2141
        %v2143 = vrot.slane %v2138, %v2142
        %2145 = vmatprep.subr.bf16.mxu0 0
        %2146 = vmatpush1.bf16.msra.mxu0 %v2122
        %2147 = vmatprep.subr.bf16.mxu0 0
        %2148 = vmatpush1.bf16.msra.mxu0 %v2123
        %2149 = vmatprep.subr.bf16.mxu0 0
        %2150 = vmatpush1.bf16.msra.mxu0 %v2124
        %2151 = vmatprep.subr.bf16.mxu0 0
        %2152 = vmatpush1.bf16.msra.mxu0 %v2125
        %2153 = vmatprep.subr.bf16.mxu0 0
        %2154 = vmatpush1.bf16.msra.mxu0 %v2126
        %2155 = vmatprep.subr.bf16.mxu0 0
        %2156 = vmatpush1.bf16.msra.mxu0 %v2127
        %2157 = vmatprep.subr.bf16.mxu0 0
        %2158 = vmatpush1.bf16.msra.mxu0 %v2128
        %2159 = vmatprep.subr.bf16.mxu0 0
        %2160 = vmatpush1.bf16.msra.mxu0 %v2129
        %2161 = vmatprep.subr.bf16.mxu0 0
        %2162 = vmatpush1.bf16.msra.mxu0 %v2130
        %2163 = vmatprep.subr.bf16.mxu0 0
        %2164 = vmatpush1.bf16.msra.mxu0 %v2131
        %2165 = vmatprep.subr.bf16.mxu0 0
        %2166 = vmatpush1.bf16.msra.mxu0 %v2132
        %2167 = vmatprep.subr.bf16.mxu0 0
        %2168 = vmatpush1.bf16.msra.mxu0 %v2133
        %2169 = vmatprep.subr.bf16.mxu0 0
        %2170 = vmatpush1.bf16.msra.mxu0 %v2134
        %2171 = vmatprep.subr.bf16.mxu0 0
        %2172 = vmatpush1.bf16.msra.mxu0 %v2135
        %2173 = vmatprep.subr.bf16.mxu0 0
        %2174 = vmatpush1.bf16.msra.mxu0 %v2136
        %2175 = vmatprep.subr.bf16.mxu0 0
        %2176 = vmatpush1.bf16.msra.mxu0 %v2137
        %2177 = vmatprep.mubr.bf16.mxu0 %v2089
        %2178 = vmatmul.mubr.bf16.gmra.mrb[0].mxu0 %v2088
        %v2179 = vpop.f32.mrb[0].mxu0
        %v2180 = vadd.f32 %v2143, %v2179
        %v2181 = vpop.f32.mrb[0].mxu0
        %v2182 = vpop.f32.mrb[0].mxu0
        %v2183 = vadd.f32 %v2143, %v2182
        %v2184 = vpop.f32.mrb[0].mxu0
        %2185 = vdwg.mxu0
        %v2186 = vadd.f32 %v1922, %v2180
        %v2187 = vadd.f32 %v1923, %v2183
        %2188 = vst [vmem:[#allocation2] sm:$0xff] %v2186
        %2189 = vst [vmem:[#allocation2 + $0x8] sm:$0xff] %v2187
        %p2190 = scmp.eq.s32.totalorder %s37, 1
        // Predicated region
        $region97: #{_lambda_.1} parent=91 // pred_check
          %p2191 = pneg %p2190
        $region98: #{_lambda_.1} parent=91 // pred_check_branch
          %2193 = sbr.rel (%p2191) target = $region100
        $region99: #{_lambda_.1} parent=91 // pred_region
          %v2194 = vld [vmem:[%s16] sm:$0x1]
          %v2195 = vld [vmem:[%s17] sm:$0x1]
          %vm2196 = vcmask 1047553
          %v2197 = vsel %vm2196, %v2186, 0.0
          %2198 = vadd.xlane.f32.xlu0 %v2197
          %v2199 = vpop.xlane.xlu0 %2198
          %vm2200 = vcmask 1040384
          %v2201 = vsel %vm2200, %v2187, 0.0
          %2202 = vadd.xlane.f32.xlu0 %v2201
          %v2203 = vpop.xlane.xlu0 %2202
          %v2204 = vmul.f32 %v2199, %v978
          %v2205 = vmul.f32 %v2203, %v978
          %v2206 = vsub.f32 %v2186, %v2204
          %v2207 = vsub.f32 %v2187, %v2205
          %v2208 = vmul.f32 %v2206, %v2206
          %v2209 = vmul.f32 %v2207, %v2207
          %v2210 = vsel %vm2196, %v2208, 0.0
          %2211 = vadd.xlane.f32.xlu0 %v2210
          %v2212 = vpop.xlane.xlu0 %2211
          %v2213 = vsel %vm2200, %v2209, 0.0
          %2214 = vadd.xlane.f32.xlu0 %v2213
          %v2215 = vpop.xlane.xlu0 %2214
          %v2216 = vmul.f32 %v2212, %v978
          %v2217 = vmul.f32 %v2215, %v978
          %v2218 = vadd.f32 %v2216, 1e-05
          %v2219 = vadd.f32 %v2217, 1e-05
          %v2220 = vrsqrt.pop %v2218
          %v2221 = vrsqrt.pop %v2219
          %v2222 = vmul.f32 %v2206, %v2220
          %v2223 = vmul.f32 %v2207, %v2221
          %v2225 = vlaneseq
          %v2226 = vshrl.u32 %v2225, 7
          %v2227 = vsub.s32 0, %v2226
          %v2228 = vrot.slane %v2194, %v2227
          %v2230 = vmul.f32 %v2222, %v2228
          %v2231 = vmul.f32 %v2223, %v2228
          %v2233 = vlaneseq
          %v2234 = vshrl.u32 %v2233, 7
          %v2235 = vsub.s32 0, %v2234
          %v2236 = vrot.slane %v2195, %v2235
          %v2238 = vadd.f32 %v2230, %v2236
          %v2239 = vadd.f32 %v2231, %v2236
          %2240 = vst [vmem:[%s719 - $0x1] sm:$0xfe] %v2238
          %2241 = vst [vmem:[%s719 + $0x7] sm:$0x1] %v2239
        $region100: #{_lambda_.1} parent=91 // pred_fallthru
          _
        %s2242 = sand.u32 %s490, 1
        %s2243 = scalar_lea.sflag [#allocation4], %s2242
        %s2244 = sand.u32 %s490, 1
        %s2245 = smul.addr %s2244, 8
        %s2246 = scalar_lea.vmem [#allocation3], %s2245
        // Predicated region
        $region101: #{_lambda_.1} parent=91 // pred_check
          %p2247 = pneg %p500
        $region102: #{_lambda_.1} parent=91 // pred_check_branch
          %2249 = sbr.rel (%p2247) target = $region104
        $region103: #{_lambda_.1} parent=91 // pred_region
          %s2251 = ssub.s32 128, 128
          %2252 = vsyncadd %s2243, %s2251
          %s2253 = smul.addr %s36, 128
          %s2254 = scalar_lea.hbm %s18, %s2253
          %s2256 = sshll.u32 %s2246, 4
          %s2257 = int_to_ptr.vmem [resolvable:$true] %s2256
          %2259 = dma.vmem_to_hbm [thread:$0]  %s2257, 128, %s2254, %s2243
        $region104: #{_lambda_.1} parent=91 // pred_fallthru
          _
      $region92: #{_lambda_.1} parent=5 // pred_fallthru
        _
      %p2260 = scmp.le.s32.totalorder 2, %s27
      // Predicated region
      $region105: #{_lambda_.1} parent=5 // pred_check
        %p2261 = pneg %p2260
      $region106: #{_lambda_.1} parent=5 // pred_check_branch
        %2263 = sbr.rel (%p2261) target = $region108
      $region107: #{_lambda_.1} parent=5 // pred_region
        %s2264 = ssub.s32 %s27, 2
        // Predicated region
        $region109: #{_lambda_.1} parent=107 // pred_check
          %p2265 = pneg %p506
        $region110: #{_lambda_.1} parent=107 // pred_check_branch
          %2267 = sbr.rel (%p2265) target = $region112
        $region111: #{_lambda_.1} parent=107 // pred_region
          %s2268 = sand.u32 %s491, 1
          %s2269 = scalar_lea.sflag [#allocation4], %s2268
          %s2270 = sand.u32 %s491, 1
          %s2271 = smul.addr %s2270, 8
          %s2272 = scalar_lea.vmem [#allocation3], %s2271
          %2273 = dma.done %s2269, 128
        $region112: #{_lambda_.1} parent=107 // pred_fallthru
          _
      $region108: #{_lambda_.1} parent=5 // pred_fallthru
        _
    $region6: #{_lambda_.1} parent=1 // loop_footer
      %s31 = sadd.s32 1, %s27
    $region7: #{_lambda_.1} parent=1 // loop_footer_branch
      %26 = sbr.rel target = $region3
    $region8: #{_lambda_.1} parent=1 // loop_exit
      _
    %2274 = vsyncpa [#allocation4], 1
    %s2275 = scalar_lea.sflag [#allocation4], 1
    %2276 = vsyncpa %s2275, 1

</llo_original>
